<compile_context>
chip_gen: v5e
topology: v5e:2x2
jax: 0.10.0
libtpu: 0.0.40
codegen_flags: <defaults>
</compile_context>

<pallas_src>
import functools
import math

import jax
import jax.numpy as jnp
from jax.experimental import pallas as pl
from jax.experimental.pallas import tpu as pltpu

BN_EPS = 1e-5


# ----------------------------------------------------------------------------
# Fused kernel: all nb_layers of (BN -> ReLU -> Conv3x3) for one batch element.
# ----------------------------------------------------------------------------
def _osa_fused_kernel(x_ref, m_ref, *rest, nb_layers):
    # x_ref:   (1, R0, WpC)          R0 = H + 2*L rows (ring + margin zero-rows),
    #                                WpC = (W+2)*C_pad lanes, layout [xo*C_pad + c].
    # m_ref:   (L, 3, WpC, WpC)      banded conv matrices, one per (layer, dy).
    # rest:    L scale refs (R_l, WpC), L shift refs (R_l, WpC), then o_ref.
    #          scale/shift are pre-broadcast, ring/margin/pad-channel masked:
    #          b = relu(a*scale + shift) is exactly 0 on every padding position.
    # o_ref:   (1, H, WpC)
    scale_refs = rest[:nb_layers]
    shift_refs = rest[nb_layers:2 * nb_layers]
    o_ref = rest[2 * nb_layers]

    a = x_ref[0]                                              # (R_l, WpC), l = 0
    for l in range(nb_layers):
        # Folded BN + ReLU; masked scale/shift also zero the conv's padding ring.
        b = jnp.maximum(a * scale_refs[l][...] + shift_refs[l][...], 0.0)
        r_out = a.shape[0] - 2
        # 3x3 conv = sum over dy of (rows shifted by dy) @ banded(dx, ci, co).
        acc = jnp.dot(b[0:r_out, :], m_ref[l, 0],
                      preferred_element_type=jnp.float32)
        acc = acc + jnp.dot(b[1:1 + r_out, :], m_ref[l, 1],
                            preferred_element_type=jnp.float32)
        acc = acc + jnp.dot(b[2:2 + r_out, :], m_ref[l, 2],
                            preferred_element_type=jnp.float32)
        a = acc                                               # (R_l - 2, WpC)

    o_ref[0] = a                                              # (H, WpC)


# ----------------------------------------------------------------------------
# Parameter packing (done once, outside the kernel).
# ----------------------------------------------------------------------------
def pack_osablock_params(params, H, W):
    """params: list of (bn_scale, bn_shift, w_hwio) per layer."""
    L = len(params)
    Wp = W + 2
    cmax = max(max(p[2].shape[2], p[2].shape[3]) for p in params)
    C_pad = ((cmax + 7) // 8) * 8
    Cout = params[-1][2].shape[3]
    WpC = Wp * C_pad

    # T[dx, xi, xo] = 1 iff tap column xi == xo - 1 + dx and xo is an interior
    # output column (ring output columns are forced to exact zeros).
    xo = jnp.arange(Wp)
    xi = jnp.arange(Wp)
    dx = jnp.arange(3)
    T = ((xi[None, :, None] == (xo[None, None, :] - 1 + dx[:, None, None]))
         & (xo[None, None, :] >= 1) & (xo[None, None, :] <= W)
         ).astype(jnp.float32)                                # (3, Wp, Wp)
    col_mask = ((jnp.arange(Wp) >= 1) & (jnp.arange(Wp) <= W)
                ).astype(jnp.float32)                          # (Wp,)

    m_list, scale_list, shift_list = [], [], []
    for l, (scale, shift, w_hwio) in enumerate(params):
        Cin_l, Cout_l = w_hwio.shape[2], w_hwio.shape[3]
        w_pad = jnp.zeros((3, 3, C_pad, C_pad), jnp.float32)
        w_pad = w_pad.at[:, :, :Cin_l, :Cout_l].set(w_hwio.astype(jnp.float32))
        # M[dy, xi*C+ci, xo*C+co] = w[dy, xi-xo+1, ci, co] on the valid band.
        M = jnp.einsum('dio,gdcf->gicof', T, w_pad)            # (3,Wp,C,Wp,C)
        m_list.append(M.reshape(3, WpC, WpC))

        # Layer-l input has R_l = H + 2*(L-l) rows; interior rows [L-l, L-l+H).
        R_l = H + 2 * (L - l)
        rows = jnp.arange(R_l)
        row_mask = ((rows >= (L - l)) & (rows < (L - l + H))
                    ).astype(jnp.float32)                      # (R_l,)
        sc = jnp.zeros((C_pad,), jnp.float32).at[:Cin_l].set(scale.astype(jnp.float32))
        sh = jnp.zeros((C_pad,), jnp.float32).at[:Cin_l].set(shift.astype(jnp.float32))
        sb = row_mask[:, None, None] * col_mask[None, :, None] * sc[None, None, :]
        hb = row_mask[:, None, None] * col_mask[None, :, None] * sh[None, None, :]
        scale_list.append(sb.reshape(R_l, WpC))
        shift_list.append(hb.reshape(R_l, WpC))

    m_all = jnp.stack(m_list, axis=0)                          # (L, 3, WpC, WpC)
    return m_all, scale_list, shift_list, C_pad, Cout


# ----------------------------------------------------------------------------
# Forward wrapper (NCHW in / NCHW out, PyTorch convention).
# ----------------------------------------------------------------------------
def osablock_forward(x_nchw, packed):
    m_all, scales_b, shifts_b, C_pad, Cout = packed
    N, Cin, H, W = x_nchw.shape
    L = m_all.shape[0]
    Wp = W + 2
    R0 = H + 2 * L
    WpC = Wp * C_pad

    # One tiny layout prep per block call (not per layer): NCHW -> padded,
    # lane-flattened (N, R0, (W+2)*C_pad) with zero ring/margins/pad-channels.
    x = jnp.transpose(x_nchw, (0, 2, 3, 1)).astype(jnp.float32)      # NHWC
    x = jnp.pad(x, ((0, 0), (L, L), (1, 1), (0, C_pad - Cin)))
    x = x.reshape(N, R0, WpC)

    in_specs = [
        pl.BlockSpec((1, R0, WpC), lambda n: (n, 0, 0)),             # x (per batch)
        pl.BlockSpec(m_all.shape, lambda n: (0, 0, 0, 0)),           # weights (resident)
    ]
    for l in range(L):
        in_specs.append(pl.BlockSpec(scales_b[l].shape, lambda n: (0, 0)))
    for l in range(L):
        in_specs.append(pl.BlockSpec(shifts_b[l].shape, lambda n: (0, 0)))

    out = pl.pallas_call(
        functools.partial(_osa_fused_kernel, nb_layers=L),
        out_shape=jax.ShapeDtypeStruct((N, H, WpC), jnp.float32),
        grid=(N,),
        in_specs=in_specs,
        out_specs=pl.BlockSpec((1, H, WpC), lambda n: (n, 0, 0)),
        compiler_params=pltpu.CompilerParams(
            dimension_semantics=("parallel",)),   # batch axis -> v7x megacore
    )(x, m_all, *scales_b, *shifts_b)

    out = out.reshape(N, H, Wp, C_pad)[:, :, 1:W + 1, :Cout]         # (N,H,W,Cout)
    return jnp.transpose(out, (0, 3, 1, 2))                          # NCHW


# ----------------------------------------------------------------------------
# Parameter construction (eval-mode BN folded into per-channel affine).
# ----------------------------------------------------------------------------
def make_basic_block_params(key, in_planes, out_planes):
    kg, kb, km, kv, kw = jax.random.split(key, 5)
    gamma = 1.0 + 0.1 * jax.random.normal(kg, (in_planes,), jnp.float32)
    beta = 0.1 * jax.random.normal(kb, (in_planes,), jnp.float32)
    running_mean = 0.1 * jax.random.normal(km, (in_planes,), jnp.float32)
    running_var = 1.0 + 0.5 * jax.random.uniform(kv, (in_planes,), jnp.float32)
    w_oihw = jax.random.normal(kw, (out_planes, in_planes, 3, 3),
                               jnp.float32) * math.sqrt(2.0 / (in_planes * 9))
    scale = gamma / jnp.sqrt(running_var + BN_EPS)
    shift = beta - running_mean * scale
    w_hwio = jnp.transpose(w_oihw, (2, 3, 1, 0))   # OIHW -> HWIO
    return scale, shift, w_hwio


def make_osablock_params(key, nb_layers, in_planes, growth_rate):
    # Mirrors OSABlock._make_layer; the extra aggregation block appended at the
    # end is never invoked by OSABlock.forward, so it is omitted here.
    params = []
    cin = in_planes
    for _ in range(nb_layers):
        key, sub = jax.random.split(key)
        params.append(make_basic_block_params(sub, cin, growth_rate))
        cin = growth_rate
    return params


def osablock_forward_ref(x_nchw, params):
    # Pure-JAX reference (lax conv) for numerical verification.
    x = jnp.transpose(x_nchw, (0, 2, 3, 1))
    for scale, shift, w_hwio in params:
        a = jnp.maximum(x * scale + shift, 0.0)
        x = jax.lax.conv_general_dilated(
            a, w_hwio, window_strides=(1, 1), padding="SAME",
            dimension_numbers=("NHWC", "HWIO", "NHWC"))
    return jnp.transpose(x, (0, 3, 1, 2))


if __name__ == "__main__":
    nb_layers, in_planes, growth_rate = 3, 4, 8
    N, H, W = 2, 16, 16

    key = jax.random.PRNGKey(0)
    kx, kp = jax.random.split(key)
    x = jax.random.normal(kx, (N, in_planes, H, W), jnp.float32)
    params = make_osablock_params(kp, nb_layers, in_planes, growth_rate)
    packed = pack_osablock_params(params, H, W)

    out = jax.block_until_ready(osablock_forward(x, packed))
    ref = jax.block_until_ready(osablock_forward_ref(x, params))

    assert out.shape == (N, growth_rate, H, W), out.shape
    err = float(jnp.max(jnp.abs(out - ref)))
    assert jnp.allclose(out, ref, atol=1e-3, rtol=1e-3), err
    print("KERNEL_OK")
</pallas_src>

<mosaic_0001>
module attributes {stable_mosaic.version = 11 : i64} {
  func.func @_osa_fused_kernel(%arg0: i32, %arg1: memref<1x22x144xf32, #tpu.memory_space<vmem>>, %arg2: memref<3x3x144x144xf32, #tpu.memory_space<vmem>>, %arg3: memref<22x144xf32, #tpu.memory_space<vmem>>, %arg4: memref<20x144xf32, #tpu.memory_space<vmem>>, %arg5: memref<18x144xf32, #tpu.memory_space<vmem>>, %arg6: memref<22x144xf32, #tpu.memory_space<vmem>>, %arg7: memref<20x144xf32, #tpu.memory_space<vmem>>, %arg8: memref<18x144xf32, #tpu.memory_space<vmem>>, %arg9: memref<1x16x144xf32, #tpu.memory_space<vmem>>) attributes {dimension_semantics = [#tpu.dimension_semantics<parallel>], iteration_bounds = array<i64: 2>, scalar_prefetch = 0 : i64, scratch_operands = 0 : i64, tpu.core_type = #tpu.core_type<tc>, window_params = [{transform_indices = @transform_0, window_bounds = array<i64: 1, 22, 144>}, {pipeline_mode = #tpu.pipeline_mode<synchronous>, transform_indices = @transform_1, window_bounds = array<i64: 3, 3, 144, 144>}, {pipeline_mode = #tpu.pipeline_mode<synchronous>, transform_indices = @transform_2, window_bounds = array<i64: 22, 144>}, {pipeline_mode = #tpu.pipeline_mode<synchronous>, transform_indices = @transform_3, window_bounds = array<i64: 20, 144>}, {pipeline_mode = #tpu.pipeline_mode<synchronous>, transform_indices = @transform_4, window_bounds = array<i64: 18, 144>}, {pipeline_mode = #tpu.pipeline_mode<synchronous>, transform_indices = @transform_5, window_bounds = array<i64: 22, 144>}, {pipeline_mode = #tpu.pipeline_mode<synchronous>, transform_indices = @transform_6, window_bounds = array<i64: 20, 144>}, {pipeline_mode = #tpu.pipeline_mode<synchronous>, transform_indices = @transform_7, window_bounds = array<i64: 18, 144>}, {transform_indices = @transform_8, window_bounds = array<i64: 1, 16, 144>}]} {
    %c0 = arith.constant 0 : index
    %c0_0 = arith.constant 0 : index
    %c0_1 = arith.constant 0 : index
    %0 = vector.load %arg1[%c0, %c0_0, %c0_1] : memref<1x22x144xf32, #tpu.memory_space<vmem>>, vector<1x22x144xf32>
    %1 = vector.shape_cast %0 : vector<1x22x144xf32> to vector<22x144xf32>
    %c0_2 = arith.constant 0 : index
    %c0_3 = arith.constant 0 : index
    %2 = vector.load %arg3[%c0_2, %c0_3] : memref<22x144xf32, #tpu.memory_space<vmem>>, vector<22x144xf32>
    %3 = arith.mulf %1, %2 : vector<22x144xf32>
    %c0_4 = arith.constant 0 : index
    %c0_5 = arith.constant 0 : index
    %4 = vector.load %arg6[%c0_4, %c0_5] : memref<22x144xf32, #tpu.memory_space<vmem>>, vector<22x144xf32>
    %5 = arith.addf %3, %4 : vector<22x144xf32>
    %cst = arith.constant 0.000000e+00 : f32
    %6 = vector.broadcast %cst : f32 to vector<22x144xf32>
    %7 = arith.maximumf %5, %6 : vector<22x144xf32>
    %8 = vector.extract_strided_slice %7 {offsets = [0, 0], sizes = [20, 144], strides = [1, 1]} : vector<22x144xf32> to vector<20x144xf32>
    %c0_6 = arith.constant 0 : index
    %c0_7 = arith.constant 0 : index
    %c0_8 = arith.constant 0 : index
    %c0_9 = arith.constant 0 : index
    %9 = vector.load %arg2[%c0_6, %c0_7, %c0_8, %c0_9] : memref<3x3x144x144xf32, #tpu.memory_space<vmem>>, vector<1x1x144x144xf32>
    %10 = vector.shape_cast %9 : vector<1x1x144x144xf32> to vector<144x144xf32>
    %cst_10 = arith.constant dense<0.000000e+00> : vector<20x144xf32>
    %11 = tpu.matmul %8, %10, %cst_10 {dimension_numbers = #tpu.dot_dimension_numbers<[1], [0], [0], [1], [0, 0, 1, 1], [], []>} : vector<20x144xf32>, vector<144x144xf32>, vector<20x144xf32> -> vector<20x144xf32>
    %12 = vector.extract_strided_slice %7 {offsets = [1, 0], sizes = [20, 144], strides = [1, 1]} : vector<22x144xf32> to vector<20x144xf32>
    %c0_11 = arith.constant 0 : index
    %c1 = arith.constant 1 : index
    %c0_12 = arith.constant 0 : index
    %c0_13 = arith.constant 0 : index
    %13 = vector.load %arg2[%c0_11, %c1, %c0_12, %c0_13] : memref<3x3x144x144xf32, #tpu.memory_space<vmem>>, vector<1x1x144x144xf32>
    %14 = vector.shape_cast %13 : vector<1x1x144x144xf32> to vector<144x144xf32>
    %cst_14 = arith.constant dense<0.000000e+00> : vector<20x144xf32>
    %15 = tpu.matmul %12, %14, %cst_14 {dimension_numbers = #tpu.dot_dimension_numbers<[1], [0], [0], [1], [0, 0, 1, 1], [], []>} : vector<20x144xf32>, vector<144x144xf32>, vector<20x144xf32> -> vector<20x144xf32>
    %16 = arith.addf %11, %15 : vector<20x144xf32>
    %17 = vector.extract_strided_slice %7 {offsets = [2, 0], sizes = [20, 144], strides = [1, 1]} : vector<22x144xf32> to vector<20x144xf32>
    %c0_15 = arith.constant 0 : index
    %c2 = arith.constant 2 : index
    %c0_16 = arith.constant 0 : index
    %c0_17 = arith.constant 0 : index
    %18 = vector.load %arg2[%c0_15, %c2, %c0_16, %c0_17] : memref<3x3x144x144xf32, #tpu.memory_space<vmem>>, vector<1x1x144x144xf32>
    %19 = vector.shape_cast %18 : vector<1x1x144x144xf32> to vector<144x144xf32>
    %cst_18 = arith.constant dense<0.000000e+00> : vector<20x144xf32>
    %20 = tpu.matmul %17, %19, %cst_18 {dimension_numbers = #tpu.dot_dimension_numbers<[1], [0], [0], [1], [0, 0, 1, 1], [], []>} : vector<20x144xf32>, vector<144x144xf32>, vector<20x144xf32> -> vector<20x144xf32>
    %21 = arith.addf %16, %20 : vector<20x144xf32>
    %c0_19 = arith.constant 0 : index
    %c0_20 = arith.constant 0 : index
    %22 = vector.load %arg4[%c0_19, %c0_20] : memref<20x144xf32, #tpu.memory_space<vmem>>, vector<20x144xf32>
    %23 = arith.mulf %21, %22 : vector<20x144xf32>
    %c0_21 = arith.constant 0 : index
    %c0_22 = arith.constant 0 : index
    %24 = vector.load %arg7[%c0_21, %c0_22] : memref<20x144xf32, #tpu.memory_space<vmem>>, vector<20x144xf32>
    %25 = arith.addf %23, %24 : vector<20x144xf32>
    %cst_23 = arith.constant 0.000000e+00 : f32
    %26 = vector.broadcast %cst_23 : f32 to vector<20x144xf32>
    %27 = arith.maximumf %25, %26 : vector<20x144xf32>
    %28 = vector.extract_strided_slice %27 {offsets = [0, 0], sizes = [18, 144], strides = [1, 1]} : vector<20x144xf32> to vector<18x144xf32>
    %c1_24 = arith.constant 1 : index
    %c0_25 = arith.constant 0 : index
    %c0_26 = arith.constant 0 : index
    %c0_27 = arith.constant 0 : index
    %29 = vector.load %arg2[%c1_24, %c0_25, %c0_26, %c0_27] : memref<3x3x144x144xf32, #tpu.memory_space<vmem>>, vector<1x1x144x144xf32>
    %30 = vector.shape_cast %29 : vector<1x1x144x144xf32> to vector<144x144xf32>
    %cst_28 = arith.constant dense<0.000000e+00> : vector<18x144xf32>
    %31 = tpu.matmul %28, %30, %cst_28 {dimension_numbers = #tpu.dot_dimension_numbers<[1], [0], [0], [1], [0, 0, 1, 1], [], []>} : vector<18x144xf32>, vector<144x144xf32>, vector<18x144xf32> -> vector<18x144xf32>
    %32 = vector.extract_strided_slice %27 {offsets = [1, 0], sizes = [18, 144], strides = [1, 1]} : vector<20x144xf32> to vector<18x144xf32>
    %c1_29 = arith.constant 1 : index
    %c1_30 = arith.constant 1 : index
    %c0_31 = arith.constant 0 : index
    %c0_32 = arith.constant 0 : index
    %33 = vector.load %arg2[%c1_29, %c1_30, %c0_31, %c0_32] : memref<3x3x144x144xf32, #tpu.memory_space<vmem>>, vector<1x1x144x144xf32>
    %34 = vector.shape_cast %33 : vector<1x1x144x144xf32> to vector<144x144xf32>
    %cst_33 = arith.constant dense<0.000000e+00> : vector<18x144xf32>
    %35 = tpu.matmul %32, %34, %cst_33 {dimension_numbers = #tpu.dot_dimension_numbers<[1], [0], [0], [1], [0, 0, 1, 1], [], []>} : vector<18x144xf32>, vector<144x144xf32>, vector<18x144xf32> -> vector<18x144xf32>
    %36 = arith.addf %31, %35 : vector<18x144xf32>
    %37 = vector.extract_strided_slice %27 {offsets = [2, 0], sizes = [18, 144], strides = [1, 1]} : vector<20x144xf32> to vector<18x144xf32>
    %c1_34 = arith.constant 1 : index
    %c2_35 = arith.constant 2 : index
    %c0_36 = arith.constant 0 : index
    %c0_37 = arith.constant 0 : index
    %38 = vector.load %arg2[%c1_34, %c2_35, %c0_36, %c0_37] : memref<3x3x144x144xf32, #tpu.memory_space<vmem>>, vector<1x1x144x144xf32>
    %39 = vector.shape_cast %38 : vector<1x1x144x144xf32> to vector<144x144xf32>
    %cst_38 = arith.constant dense<0.000000e+00> : vector<18x144xf32>
    %40 = tpu.matmul %37, %39, %cst_38 {dimension_numbers = #tpu.dot_dimension_numbers<[1], [0], [0], [1], [0, 0, 1, 1], [], []>} : vector<18x144xf32>, vector<144x144xf32>, vector<18x144xf32> -> vector<18x144xf32>
    %41 = arith.addf %36, %40 : vector<18x144xf32>
    %c0_39 = arith.constant 0 : index
    %c0_40 = arith.constant 0 : index
    %42 = vector.load %arg5[%c0_39, %c0_40] : memref<18x144xf32, #tpu.memory_space<vmem>>, vector<18x144xf32>
    %43 = arith.mulf %41, %42 : vector<18x144xf32>
    %c0_41 = arith.constant 0 : index
    %c0_42 = arith.constant 0 : index
    %44 = vector.load %arg8[%c0_41, %c0_42] : memref<18x144xf32, #tpu.memory_space<vmem>>, vector<18x144xf32>
    %45 = arith.addf %43, %44 : vector<18x144xf32>
    %cst_43 = arith.constant 0.000000e+00 : f32
    %46 = vector.broadcast %cst_43 : f32 to vector<18x144xf32>
    %47 = arith.maximumf %45, %46 : vector<18x144xf32>
    %48 = vector.extract_strided_slice %47 {offsets = [0, 0], sizes = [16, 144], strides = [1, 1]} : vector<18x144xf32> to vector<16x144xf32>
    %c2_44 = arith.constant 2 : index
    %c0_45 = arith.constant 0 : index
    %c0_46 = arith.constant 0 : index
    %c0_47 = arith.constant 0 : index
    %49 = vector.load %arg2[%c2_44, %c0_45, %c0_46, %c0_47] : memref<3x3x144x144xf32, #tpu.memory_space<vmem>>, vector<1x1x144x144xf32>
    %50 = vector.shape_cast %49 : vector<1x1x144x144xf32> to vector<144x144xf32>
    %cst_48 = arith.constant dense<0.000000e+00> : vector<16x144xf32>
    %51 = tpu.matmul %48, %50, %cst_48 {dimension_numbers = #tpu.dot_dimension_numbers<[1], [0], [0], [1], [0, 0, 1, 1], [], []>} : vector<16x144xf32>, vector<144x144xf32>, vector<16x144xf32> -> vector<16x144xf32>
    %52 = vector.extract_strided_slice %47 {offsets = [1, 0], sizes = [16, 144], strides = [1, 1]} : vector<18x144xf32> to vector<16x144xf32>
    %c2_49 = arith.constant 2 : index
    %c1_50 = arith.constant 1 : index
    %c0_51 = arith.constant 0 : index
    %c0_52 = arith.constant 0 : index
    %53 = vector.load %arg2[%c2_49, %c1_50, %c0_51, %c0_52] : memref<3x3x144x144xf32, #tpu.memory_space<vmem>>, vector<1x1x144x144xf32>
    %54 = vector.shape_cast %53 : vector<1x1x144x144xf32> to vector<144x144xf32>
    %cst_53 = arith.constant dense<0.000000e+00> : vector<16x144xf32>
    %55 = tpu.matmul %52, %54, %cst_53 {dimension_numbers = #tpu.dot_dimension_numbers<[1], [0], [0], [1], [0, 0, 1, 1], [], []>} : vector<16x144xf32>, vector<144x144xf32>, vector<16x144xf32> -> vector<16x144xf32>
    %56 = arith.addf %51, %55 : vector<16x144xf32>
    %57 = vector.extract_strided_slice %47 {offsets = [2, 0], sizes = [16, 144], strides = [1, 1]} : vector<18x144xf32> to vector<16x144xf32>
    %c2_54 = arith.constant 2 : index
    %c2_55 = arith.constant 2 : index
    %c0_56 = arith.constant 0 : index
    %c0_57 = arith.constant 0 : index
    %58 = vector.load %arg2[%c2_54, %c2_55, %c0_56, %c0_57] : memref<3x3x144x144xf32, #tpu.memory_space<vmem>>, vector<1x1x144x144xf32>
    %59 = vector.shape_cast %58 : vector<1x1x144x144xf32> to vector<144x144xf32>
    %cst_58 = arith.constant dense<0.000000e+00> : vector<16x144xf32>
    %60 = tpu.matmul %57, %59, %cst_58 {dimension_numbers = #tpu.dot_dimension_numbers<[1], [0], [0], [1], [0, 0, 1, 1], [], []>} : vector<16x144xf32>, vector<144x144xf32>, vector<16x144xf32> -> vector<16x144xf32>
    %61 = arith.addf %56, %60 : vector<16x144xf32>
    %c0_59 = arith.constant 0 : index
    %c0_60 = arith.constant 0 : index
    %c0_61 = arith.constant 0 : index
    %62 = vector.load %arg9[%c0_59, %c0_60, %c0_61] : memref<1x16x144xf32, #tpu.memory_space<vmem>>, vector<1x16x144xf32>
    %63 = vector.shape_cast %62 : vector<1x16x144xf32> to vector<16x144xf32>
    %64 = vector.shape_cast %61 : vector<16x144xf32> to vector<1x16x144xf32>
    tpu.vector_store %arg9[%c0_59, %c0_60, %c0_61], %64 {strides = array<i32>} : memref<1x16x144xf32, #tpu.memory_space<vmem>>, vector<1x16x144xf32>,
    return
  }
  func.func @transform_0(%arg0: i32) -> (i32, i32, i32) {
    %c0_i32 = arith.constant 0 : i32
    %c0_i32_0 = arith.constant 0 : i32
    %c0_i32_1 = arith.constant 0 : i32
    return %arg0, %c0_i32, %c0_i32_0 : i32, i32, i32
  }
  func.func @transform_1(%arg0: i32) -> (i32, i32, i32, i32) {
    %c0_i32 = arith.constant 0 : i32
    %c0_i32_0 = arith.constant 0 : i32
    %c0_i32_1 = arith.constant 0 : i32
    %c0_i32_2 = arith.constant 0 : i32
    %c0_i32_3 = arith.constant 0 : i32
    return %c0_i32, %c0_i32_0, %c0_i32_1, %c0_i32_2 : i32, i32, i32, i32
  }
  func.func @transform_2(%arg0: i32) -> (i32, i32) {
    %c0_i32 = arith.constant 0 : i32
    %c0_i32_0 = arith.constant 0 : i32
    %c0_i32_1 = arith.constant 0 : i32
    return %c0_i32, %c0_i32_0 : i32, i32
  }
  func.func @transform_3(%arg0: i32) -> (i32, i32) {
    %c0_i32 = arith.constant 0 : i32
    %c0_i32_0 = arith.constant 0 : i32
    %c0_i32_1 = arith.constant 0 : i32
    return %c0_i32, %c0_i32_0 : i32, i32
  }
  func.func @transform_4(%arg0: i32) -> (i32, i32) {
    %c0_i32 = arith.constant 0 : i32
    %c0_i32_0 = arith.constant 0 : i32
    %c0_i32_1 = arith.constant 0 : i32
    return %c0_i32, %c0_i32_0 : i32, i32
  }
  func.func @transform_5(%arg0: i32) -> (i32, i32) {
    %c0_i32 = arith.constant 0 : i32
    %c0_i32_0 = arith.constant 0 : i32
    %c0_i32_1 = arith.constant 0 : i32
    return %c0_i32, %c0_i32_0 : i32, i32
  }
  func.func @transform_6(%arg0: i32) -> (i32, i32) {
    %c0_i32 = arith.constant 0 : i32
    %c0_i32_0 = arith.constant 0 : i32
    %c0_i32_1 = arith.constant 0 : i32
    return %c0_i32, %c0_i32_0 : i32, i32
  }
  func.func @transform_7(%arg0: i32) -> (i32, i32) {
    %c0_i32 = arith.constant 0 : i32
    %c0_i32_0 = arith.constant 0 : i32
    %c0_i32_1 = arith.constant 0 : i32
    return %c0_i32, %c0_i32_0 : i32, i32
  }
  func.func @transform_8(%arg0: i32) -> (i32, i32, i32) {
    %c0_i32 = arith.constant 0 : i32
    %c0_i32_0 = arith.constant 0 : i32
    %c0_i32_1 = arith.constant 0 : i32
    return %arg0, %c0_i32, %c0_i32_0 : i32, i32, i32
  }
}

</mosaic_0001>

<llo_original>
// kernel: tpu_custom_call.1
$region0: #{tpu_custom_call.1}
  #allocation0 [shape = 'u32[]', space=smem, size = 0x4, offset = 0x4, fixed_abs, tag = 'smem constant byte address 0x4 - core index']
  #allocation1 [shape = 'u32[72,128]{1,0:T(1,128)}', space=vmem, size = 0x9000, scoped, tag = 'internal scratch']
  %s0 = inlined_call_operand.vmem [shape: f32[2,22,144], index: 0, kind: input, shape index: {}]
  %s1 = inlined_call_operand.hbm [shape: f32[3,3,144,144], index: 1, kind: input, shape index: {}]
  %s2 = inlined_call_operand.hbm [shape: f32[22,144], index: 2, kind: input, shape index: {}]
  %s3 = inlined_call_operand.hbm [shape: f32[20,144], index: 3, kind: input, shape index: {}]
  %s4 = inlined_call_operand.hbm [shape: f32[18,144], index: 4, kind: input, shape index: {}]
  %s5 = inlined_call_operand.hbm [shape: f32[22,144], index: 5, kind: input, shape index: {}]
  %s6 = inlined_call_operand.hbm [shape: f32[20,144], index: 6, kind: input, shape index: {}]
  %s7 = inlined_call_operand.hbm [shape: f32[18,144], index: 7, kind: input, shape index: {}]
  %s8 = inlined_call_operand.hbm [shape: f32[2,16,144], index: 8, kind: output, shape index: {}]
  %s9 = sld [smem:[#allocation0]]
  $region93: #{tpu_custom_call.1} parent=0
    _
  %s11 = ssub.s32 1, %s9
  %s12 = scalar_select 0, %s11, %s9
  $region1: #{tpu_custom_call.1} parent=0
    #allocation2 [shape = 'u8[1327104]{0}', space=vmem, size = 0x144000, scoped, tag = 'input window, operand 1, single buffered']
    #allocation3 [shape = 's32[2]{0}', space=sflag, size = 0x8, scoped, tag = 'scoped memory for tpu_custom_call.1']
    #allocation4 [shape = 's32[2]{0}', space=sflag, size = 0x8, scoped, tag = 'scoped memory for tpu_custom_call.1']
    #allocation5 [shape = 'u8[24576]{0}', space=vmem, size = 0x6000, scoped, tag = 'input window, operand 2, single buffered']
    #allocation6 [shape = 's32[1]{0}', space=sflag, size = 0x4, scoped, tag = 'scoped memory for tpu_custom_call.1']
    #allocation7 [shape = 'u8[24576]{0}', space=vmem, size = 0x6000, scoped, tag = 'input window, operand 3, single buffered']
    #allocation8 [shape = 'u8[24576]{0}', space=vmem, size = 0x6000, scoped, tag = 'input window, operand 4, single buffered']
    #allocation9 [shape = 's32[1]{0}', space=sflag, size = 0x4, scoped, tag = 'scoped memory for tpu_custom_call.1']
    #allocation10 [shape = 'u8[24576]{0}', space=vmem, size = 0x6000, scoped, tag = 'input window, operand 5, single buffered']
    #allocation11 [shape = 'u8[24576]{0}', space=vmem, size = 0x6000, scoped, tag = 'input window, operand 6, single buffered']
    #allocation12 [shape = 's32[1]{0}', space=sflag, size = 0x4, scoped, tag = 'scoped memory for tpu_custom_call.1']
    #allocation13 [shape = 'u8[24576]{0}', space=vmem, size = 0x6000, scoped, tag = 'input window, operand 7, single buffered']
    #allocation14 [shape = 'u8[32768]{0}', space=vmem, size = 0x8000, scoped, tag = 'output window, operand 0']
    %13 = vsyncpa [#allocation3], 0
    %14 = vsyncpa [#allocation6], 0
    %15 = vsyncpa [#allocation9], 0
    %16 = vsyncpa [#allocation12], 0
    %17 = vsyncpa [#allocation4], 0
    %s18 = scalar_lea.sflag [#allocation4], 1
    %19 = vsyncpa %s18, 0
    loop: start=0, step=1, limit=4
    $region2: #{tpu_custom_call.1} parent=1 // loop_pre_header
      _
    $region3: #{tpu_custom_call.1} parent=1 // loop_header
      %s21 = sphi 0, %s25
      %p22 = scmp.ge.s32.totalorder %s21, 4
      %s31 = sphi 0, %s33
      %s34 = sphi 0, %s31
      %s35 = sphi 0, %s34
      %s51 = sphi 0, %s35
      %s55 = sphi 0, %s55
      %s57 = sphi 0, %s55
      %s58 = sphi 0, %s57
      %s72 = sphi 0, %s58
      %s76 = sphi 0, %s76
      %s78 = sphi 0, %s76
      %s79 = sphi 0, %s78
      %s93 = sphi 0, %s79
      %s97 = sphi 0, %s97
      %s99 = sphi 0, %s97
      %s100 = sphi 0, %s99
      %s114 = sphi 0, %s100
      %s118 = sphi 0, %s118
      %s120 = sphi 0, %s118
      %s121 = sphi 0, %s120
      %s135 = sphi 0, %s121
      %s139 = sphi 0, %s139
      %s141 = sphi 0, %s139
      %s142 = sphi 0, %s141
      %s156 = sphi 0, %s142
      %s160 = sphi 0, %s160
      %s162 = sphi 0, %s160
      %s163 = sphi 0, %s162
      %s177 = sphi 0, %s163
      %s181 = sphi 0, %s181
      %s183 = sphi 0, %s181
      %s184 = sphi 0, %s183
      %s198 = sphi 0, %s184
      %s204 = sphi 0, %s206
      %s207 = sphi 0, %s204
      %s208 = sphi 0, %s207
      %s224 = sphi 0, %s208
    $region4: #{tpu_custom_call.1} parent=1 // loop_header_branch
      %24 = sbr.rel (%p22) target = $region8
    $region5: #{tpu_custom_call.1} parent=1 // loop_body
      %s26 = ssub.s32 %s21, 1
      %s27 = ssub.s32 %s21, 2
      %s28 = sadd.s32 %s21, 1
      %s29 = ssub.s32 %s21, %s28
      %p30 = scmp.eq.s32.totalorder %s29, 0
      %s32 = sadd.s32 %s31, 1
      %s33 = scalar_select %p30, %s31, %s32
      %p36 = pneg %p30
      %p37 = scmp.eq.s32.totalorder %s21, 1
      %p38 = por %p36, %p37
      %p39 = scmp.ne.s32.totalorder %s31, %s34
      %p40 = scmp.eq.s32.totalorder %s21, 0
      %p41 = por %p39, %p40
      %p42 = scmp.ne.s32.totalorder %s31, %s34
      %p43 = scmp.eq.s32.totalorder %s26, 1
      %p44 = por %p42, %p43
      %p45 = scmp.ne.s32.totalorder %s34, %s35
      %p46 = scmp.eq.s32.totalorder %s26, 0
      %p47 = por %p45, %p46
      %p48 = scmp.ne.s32.totalorder %s34, %s35
      %p49 = scmp.eq.s32.totalorder %s27, 1
      %p50 = por %p48, %p49
      %p52 = scmp.ne.s32.totalorder %s35, %s51
      %p53 = scmp.eq.s32.totalorder %s27, 0
      %p54 = por %p52, %p53
      %s56 = sadd.s32 %s55, 1
      %p59 = scmp.eq.s32.totalorder %s21, 1
      %p60 = scmp.ne.s32.totalorder %s55, %s57
      %p61 = scmp.eq.s32.totalorder %s21, 0
      %p62 = por %p60, %p61
      %p63 = scmp.ne.s32.totalorder %s55, %s57
      %p64 = scmp.eq.s32.totalorder %s26, 1
      %p65 = por %p63, %p64
      %p66 = scmp.ne.s32.totalorder %s57, %s58
      %p67 = scmp.eq.s32.totalorder %s26, 0
      %p68 = por %p66, %p67
      %p69 = scmp.ne.s32.totalorder %s57, %s58
      %p70 = scmp.eq.s32.totalorder %s27, 1
      %p71 = por %p69, %p70
      %p73 = scmp.ne.s32.totalorder %s58, %s72
      %p74 = scmp.eq.s32.totalorder %s27, 0
      %p75 = por %p73, %p74
      %s77 = sadd.s32 %s76, 1
      %p80 = scmp.eq.s32.totalorder %s21, 1
      %p81 = scmp.ne.s32.totalorder %s76, %s78
      %p82 = scmp.eq.s32.totalorder %s21, 0
      %p83 = por %p81, %p82
      %p84 = scmp.ne.s32.totalorder %s76, %s78
      %p85 = scmp.eq.s32.totalorder %s26, 1
      %p86 = por %p84, %p85
      %p87 = scmp.ne.s32.totalorder %s78, %s79
      %p88 = scmp.eq.s32.totalorder %s26, 0
      %p89 = por %p87, %p88
      %p90 = scmp.ne.s32.totalorder %s78, %s79
      %p91 = scmp.eq.s32.totalorder %s27, 1
      %p92 = por %p90, %p91
      %p94 = scmp.ne.s32.totalorder %s79, %s93
      %p95 = scmp.eq.s32.totalorder %s27, 0
      %p96 = por %p94, %p95
      %s98 = sadd.s32 %s97, 1
      %p101 = scmp.eq.s32.totalorder %s21, 1
      %p102 = scmp.ne.s32.totalorder %s97, %s99
      %p103 = scmp.eq.s32.totalorder %s21, 0
      %p104 = por %p102, %p103
      %p105 = scmp.ne.s32.totalorder %s97, %s99
      %p106 = scmp.eq.s32.totalorder %s26, 1
      %p107 = por %p105, %p106
      %p108 = scmp.ne.s32.totalorder %s99, %s100
      %p109 = scmp.eq.s32.totalorder %s26, 0
      %p110 = por %p108, %p109
      %p111 = scmp.ne.s32.totalorder %s99, %s100
      %p112 = scmp.eq.s32.totalorder %s27, 1
      %p113 = por %p111, %p112
      %p115 = scmp.ne.s32.totalorder %s100, %s114
      %p116 = scmp.eq.s32.totalorder %s27, 0
      %p117 = por %p115, %p116
      %s119 = sadd.s32 %s118, 1
      %p122 = scmp.eq.s32.totalorder %s21, 1
      %p123 = scmp.ne.s32.totalorder %s118, %s120
      %p124 = scmp.eq.s32.totalorder %s21, 0
      %p125 = por %p123, %p124
      %p126 = scmp.ne.s32.totalorder %s118, %s120
      %p127 = scmp.eq.s32.totalorder %s26, 1
      %p128 = por %p126, %p127
      %p129 = scmp.ne.s32.totalorder %s120, %s121
      %p130 = scmp.eq.s32.totalorder %s26, 0
      %p131 = por %p129, %p130
      %p132 = scmp.ne.s32.totalorder %s120, %s121
      %p133 = scmp.eq.s32.totalorder %s27, 1
      %p134 = por %p132, %p133
      %p136 = scmp.ne.s32.totalorder %s121, %s135
      %p137 = scmp.eq.s32.totalorder %s27, 0
      %p138 = por %p136, %p137
      %s140 = sadd.s32 %s139, 1
      %p143 = scmp.eq.s32.totalorder %s21, 1
      %p144 = scmp.ne.s32.totalorder %s139, %s141
      %p145 = scmp.eq.s32.totalorder %s21, 0
      %p146 = por %p144, %p145
      %p147 = scmp.ne.s32.totalorder %s139, %s141
      %p148 = scmp.eq.s32.totalorder %s26, 1
      %p149 = por %p147, %p148
      %p150 = scmp.ne.s32.totalorder %s141, %s142
      %p151 = scmp.eq.s32.totalorder %s26, 0
      %p152 = por %p150, %p151
      %p153 = scmp.ne.s32.totalorder %s141, %s142
      %p154 = scmp.eq.s32.totalorder %s27, 1
      %p155 = por %p153, %p154
      %p157 = scmp.ne.s32.totalorder %s142, %s156
      %p158 = scmp.eq.s32.totalorder %s27, 0
      %p159 = por %p157, %p158
      %s161 = sadd.s32 %s160, 1
      %p164 = scmp.eq.s32.totalorder %s21, 1
      %p165 = scmp.ne.s32.totalorder %s160, %s162
      %p166 = scmp.eq.s32.totalorder %s21, 0
      %p167 = por %p165, %p166
      %p168 = scmp.ne.s32.totalorder %s160, %s162
      %p169 = scmp.eq.s32.totalorder %s26, 1
      %p170 = por %p168, %p169
      %p171 = scmp.ne.s32.totalorder %s162, %s163
      %p172 = scmp.eq.s32.totalorder %s26, 0
      %p173 = por %p171, %p172
      %p174 = scmp.ne.s32.totalorder %s162, %s163
      %p175 = scmp.eq.s32.totalorder %s27, 1
      %p176 = por %p174, %p175
      %p178 = scmp.ne.s32.totalorder %s163, %s177
      %p179 = scmp.eq.s32.totalorder %s27, 0
      %p180 = por %p178, %p179
      %s182 = sadd.s32 %s181, 1
      %p185 = scmp.eq.s32.totalorder %s21, 1
      %p186 = scmp.ne.s32.totalorder %s181, %s183
      %p187 = scmp.eq.s32.totalorder %s21, 0
      %p188 = por %p186, %p187
      %p189 = scmp.ne.s32.totalorder %s181, %s183
      %p190 = scmp.eq.s32.totalorder %s26, 1
      %p191 = por %p189, %p190
      %p192 = scmp.ne.s32.totalorder %s183, %s184
      %p193 = scmp.eq.s32.totalorder %s26, 0
      %p194 = por %p192, %p193
      %p195 = scmp.ne.s32.totalorder %s183, %s184
      %p196 = scmp.eq.s32.totalorder %s27, 1
      %p197 = por %p195, %p196
      %p199 = scmp.ne.s32.totalorder %s184, %s198
      %p200 = scmp.eq.s32.totalorder %s27, 0
      %p201 = por %p199, %p200
      %s202 = ssub.s32 %s21, %s28
      %p203 = scmp.eq.s32.totalorder %s202, 0
      %s205 = sadd.s32 %s204, 1
      %s206 = scalar_select %p203, %s204, %s205
      %p209 = pneg %p203
      %p210 = scmp.eq.s32.totalorder %s21, 1
      %p211 = por %p209, %p210
      %p212 = scmp.ne.s32.totalorder %s204, %s207
      %p213 = scmp.eq.s32.totalorder %s21, 0
      %p214 = por %p212, %p213
      %p215 = scmp.ne.s32.totalorder %s204, %s207
      %p216 = scmp.eq.s32.totalorder %s26, 1
      %p217 = por %p215, %p216
      %p218 = scmp.ne.s32.totalorder %s207, %s208
      %p219 = scmp.eq.s32.totalorder %s26, 0
      %p220 = por %p218, %p219
      %p221 = scmp.ne.s32.totalorder %s207, %s208
      %p222 = scmp.eq.s32.totalorder %s27, 1
      %p223 = por %p221, %p222
      %p225 = scmp.ne.s32.totalorder %s208, %s224
      %p226 = scmp.eq.s32.totalorder %s27, 0
      %p227 = por %p225, %p226
      %p228 = scmp.le.s32.totalorder 1, %s21
      %p229 = scmp.lt.s32.totalorder %s21, 3
      %p230 = pnand %p228, %p229
      %p231 = pneg %p230
      // Predicated region
      $region9: #{tpu_custom_call.1} parent=5 // pred_check
        _
      $region10: #{tpu_custom_call.1} parent=5 // pred_check_branch
        %233 = sbr.rel (%p230) target = $region12
      $region11: #{tpu_custom_call.1} parent=5 // pred_region
        %s234 = ssub.s32 %s21, 1
        // Predicated region
        $region13: #{tpu_custom_call.1} parent=11 // pred_check
          %p235 = pneg %p68
        $region14: #{tpu_custom_call.1} parent=11 // pred_check_branch
          %237 = sbr.rel (%p235) target = $region16
        $region15: #{tpu_custom_call.1} parent=11 // pred_region
          %239 = vsyncadd [#allocation3], 0
          %s240 = sshll.u32 %s1, 4
          %s241 = int_to_ptr.hbm [resolvable:$true] %s240
          %s242 = sshll.u32 [#allocation2], 4
          %s243 = int_to_ptr.vmem [resolvable:$true] %s242
          %248 = dma.hbm_to_vmem [thread:$0]  %s241, 41472, %s243, [#allocation3], 256, 256, 16
        $region16: #{tpu_custom_call.1} parent=11 // pred_fallthru
          _
        // Predicated region
        $region17: #{tpu_custom_call.1} parent=11 // pred_check
          %p249 = pneg %p89
        $region18: #{tpu_custom_call.1} parent=11 // pred_check_branch
          %251 = sbr.rel (%p249) target = $region20
        $region19: #{tpu_custom_call.1} parent=11 // pred_region
          %253 = vsyncadd [#allocation6], 0
          %s254 = sshll.u32 %s2, 4
          %s255 = int_to_ptr.hbm [resolvable:$true] %s254
          %s256 = sshll.u32 [#allocation5], 4
          %s257 = int_to_ptr.vmem [resolvable:$true] %s256
          %262 = dma.hbm_to_vmem [thread:$0]  %s255, 768, %s257, [#allocation6], 256, 256, 16
        $region20: #{tpu_custom_call.1} parent=11 // pred_fallthru
          _
        // Predicated region
        $region21: #{tpu_custom_call.1} parent=11 // pred_check
          %p263 = pneg %p110
        $region22: #{tpu_custom_call.1} parent=11 // pred_check_branch
          %265 = sbr.rel (%p263) target = $region24
        $region23: #{tpu_custom_call.1} parent=11 // pred_region
          %267 = vsyncadd [#allocation6], 0
          %s268 = sshll.u32 %s3, 4
          %s269 = int_to_ptr.hbm [resolvable:$true] %s268
          %s270 = sshll.u32 [#allocation7], 4
          %s271 = int_to_ptr.vmem [resolvable:$true] %s270
          %276 = dma.hbm_to_vmem [thread:$0]  %s269, 768, %s271, [#allocation6], 256, 256, 16
        $region24: #{tpu_custom_call.1} parent=11 // pred_fallthru
          _
        // Predicated region
        $region25: #{tpu_custom_call.1} parent=11 // pred_check
          %p277 = pneg %p131
        $region26: #{tpu_custom_call.1} parent=11 // pred_check_branch
          %279 = sbr.rel (%p277) target = $region28
        $region27: #{tpu_custom_call.1} parent=11 // pred_region
          %281 = vsyncadd [#allocation9], 0
          %s282 = sshll.u32 %s4, 4
          %s283 = int_to_ptr.hbm [resolvable:$true] %s282
          %s284 = sshll.u32 [#allocation8], 4
          %s285 = int_to_ptr.vmem [resolvable:$true] %s284
          %290 = dma.hbm_to_vmem [thread:$0]  %s283, 768, %s285, [#allocation9], 256, 256, 16
        $region28: #{tpu_custom_call.1} parent=11 // pred_fallthru
          _
        // Predicated region
        $region29: #{tpu_custom_call.1} parent=11 // pred_check
          %p291 = pneg %p152
        $region30: #{tpu_custom_call.1} parent=11 // pred_check_branch
          %293 = sbr.rel (%p291) target = $region32
        $region31: #{tpu_custom_call.1} parent=11 // pred_region
          %295 = vsyncadd [#allocation9], 0
          %s296 = sshll.u32 %s5, 4
          %s297 = int_to_ptr.hbm [resolvable:$true] %s296
          %s298 = sshll.u32 [#allocation10], 4
          %s299 = int_to_ptr.vmem [resolvable:$true] %s298
          %304 = dma.hbm_to_vmem [thread:$0]  %s297, 768, %s299, [#allocation9], 256, 256, 16
        $region32: #{tpu_custom_call.1} parent=11 // pred_fallthru
          _
        // Predicated region
        $region33: #{tpu_custom_call.1} parent=11 // pred_check
          %p305 = pneg %p173
        $region34: #{tpu_custom_call.1} parent=11 // pred_check_branch
          %307 = sbr.rel (%p305) target = $region36
        $region35: #{tpu_custom_call.1} parent=11 // pred_region
          %309 = vsyncadd [#allocation12], 0
          %s310 = sshll.u32 %s6, 4
          %s311 = int_to_ptr.hbm [resolvable:$true] %s310
          %s312 = sshll.u32 [#allocation11], 4
          %s313 = int_to_ptr.vmem [resolvable:$true] %s312
          %318 = dma.hbm_to_vmem [thread:$0]  %s311, 768, %s313, [#allocation12], 256, 256, 16
        $region36: #{tpu_custom_call.1} parent=11 // pred_fallthru
          _
        // Predicated region
        $region37: #{tpu_custom_call.1} parent=11 // pred_check
          %p319 = pneg %p194
        $region38: #{tpu_custom_call.1} parent=11 // pred_check_branch
          %321 = sbr.rel (%p319) target = $region40
        $region39: #{tpu_custom_call.1} parent=11 // pred_region
          %323 = vsyncadd [#allocation12], 0
          %s324 = sshll.u32 %s7, 4
          %s325 = int_to_ptr.hbm [resolvable:$true] %s324
          %s326 = sshll.u32 [#allocation13], 4
          %s327 = int_to_ptr.vmem [resolvable:$true] %s326
          %332 = dma.hbm_to_vmem [thread:$0]  %s325, 768, %s327, [#allocation12], 256, 256, 16
        $region40: #{tpu_custom_call.1} parent=11 // pred_fallthru
          _
      $region12: #{tpu_custom_call.1} parent=5 // pred_fallthru
        _
      %p333 = scmp.lt.s32.totalorder %s21, 2
      // Predicated region
      $region41: #{tpu_custom_call.1} parent=5 // pred_check
        %p334 = pneg %p333
      $region42: #{tpu_custom_call.1} parent=5 // pred_check_branch
        %336 = sbr.rel (%p334) target = $region44
      $region43: #{tpu_custom_call.1} parent=5 // pred_region
        // Predicated region
        $region45: #{tpu_custom_call.1} parent=43 // pred_check
          %p337 = pneg %p41
        $region46: #{tpu_custom_call.1} parent=43 // pred_check_branch
          %339 = sbr.rel (%p337) target = $region48
        $region47: #{tpu_custom_call.1} parent=43 // pred_region
          %p340 = scmp.lt.s32.totalorder %s21, 1
          %s341 = scalar_select %p340, %s21, 1
          %s342 = smul.addr %s341, 6
          %s343 = smul.addr %s342, 8
          %s344 = scalar_lea.vmem %s0, %s343
        $region48: #{tpu_custom_call.1} parent=43 // pred_fallthru
          _
      $region44: #{tpu_custom_call.1} parent=5 // pred_fallthru
        _
      %p345 = scmp.le.s32.totalorder 1, %s21
      %p346 = scmp.lt.s32.totalorder %s21, 3
      %p347 = pnand %p345, %p346
      %p348 = pneg %p347
      // Predicated region
      $region49: #{tpu_custom_call.1} parent=5 // pred_check
        _
      $region50: #{tpu_custom_call.1} parent=5 // pred_check_branch
        %350 = sbr.rel (%p347) target = $region52
      $region51: #{tpu_custom_call.1} parent=5 // pred_region
        %s351 = ssub.s32 %s21, 1
        // Predicated region
        $region53: #{tpu_custom_call.1} parent=51 // pred_check
          %p352 = pneg %p68
        $region54: #{tpu_custom_call.1} parent=51 // pred_check_branch
          %354 = sbr.rel (%p352) target = $region56
        $region55: #{tpu_custom_call.1} parent=51 // pred_region
          %356 = dma.done [#allocation3], 41472
        $region56: #{tpu_custom_call.1} parent=51 // pred_fallthru
          _
        // Predicated region
        $region57: #{tpu_custom_call.1} parent=51 // pred_check
          %p357 = pneg %p89
        $region58: #{tpu_custom_call.1} parent=51 // pred_check_branch
          %359 = sbr.rel (%p357) target = $region60
        $region59: #{tpu_custom_call.1} parent=51 // pred_region
          %361 = dma.done [#allocation6], 768
        $region60: #{tpu_custom_call.1} parent=51 // pred_fallthru
          _
        // Predicated region
        $region61: #{tpu_custom_call.1} parent=51 // pred_check
          %p362 = pneg %p110
        $region62: #{tpu_custom_call.1} parent=51 // pred_check_branch
          %364 = sbr.rel (%p362) target = $region64
        $region63: #{tpu_custom_call.1} parent=51 // pred_region
          %366 = dma.done [#allocation6], 768
        $region64: #{tpu_custom_call.1} parent=51 // pred_fallthru
          _
        // Predicated region
        $region65: #{tpu_custom_call.1} parent=51 // pred_check
          %p367 = pneg %p131
        $region66: #{tpu_custom_call.1} parent=51 // pred_check_branch
          %369 = sbr.rel (%p367) target = $region68
        $region67: #{tpu_custom_call.1} parent=51 // pred_region
          %371 = dma.done [#allocation9], 768
        $region68: #{tpu_custom_call.1} parent=51 // pred_fallthru
          _
        // Predicated region
        $region69: #{tpu_custom_call.1} parent=51 // pred_check
          %p372 = pneg %p152
        $region70: #{tpu_custom_call.1} parent=51 // pred_check_branch
          %374 = sbr.rel (%p372) target = $region72
        $region71: #{tpu_custom_call.1} parent=51 // pred_region
          %376 = dma.done [#allocation9], 768
        $region72: #{tpu_custom_call.1} parent=51 // pred_fallthru
          _
        // Predicated region
        $region73: #{tpu_custom_call.1} parent=51 // pred_check
          %p377 = pneg %p173
        $region74: #{tpu_custom_call.1} parent=51 // pred_check_branch
          %379 = sbr.rel (%p377) target = $region76
        $region75: #{tpu_custom_call.1} parent=51 // pred_region
          %381 = dma.done [#allocation12], 768
        $region76: #{tpu_custom_call.1} parent=51 // pred_fallthru
          _
        // Predicated region
        $region77: #{tpu_custom_call.1} parent=51 // pred_check
          %p382 = pneg %p194
        $region78: #{tpu_custom_call.1} parent=51 // pred_check_branch
          %384 = sbr.rel (%p382) target = $region80
        $region79: #{tpu_custom_call.1} parent=51 // pred_region
          %386 = dma.done [#allocation12], 768
        $region80: #{tpu_custom_call.1} parent=51 // pred_fallthru
          _
        %p387 = scmp.lt.s32.totalorder %s26, 1
        %s388 = scalar_select %p387, %s26, 1
        %s389 = smul.addr %s388, 6
        %s390 = smul.addr %s389, 8
        %s391 = scalar_lea.vmem %s0, %s390
        %p392 = pneg %p47
        %p393 = pneg %p44
        %p394 = pneg %p68
        %p395 = pneg %p65
        %p396 = pneg %p89
        %p397 = pneg %p86
        %p398 = pneg %p110
        %p399 = pneg %p107
        %p400 = pneg %p131
        %p401 = pneg %p128
        %p402 = pneg %p152
        %p403 = pneg %p149
        %p404 = pneg %p173
        %p405 = pneg %p170
        %p406 = pneg %p194
        %p407 = pneg %p191
        %p408 = pneg %p220
        %p409 = pneg %p217
        %s410 = sand.u32 %s207, 1
        %s411 = scalar_lea.sflag [#allocation4], %s410
        %s412 = sand.u32 %s207, 1
        %s413 = smul.addr %s412, 32
        %s414 = scalar_lea.vmem [#allocation14], %s413
        %p415 = scmp.lt.s32.totalorder %s26, 1
        %s416 = scalar_select %p415, %s26, 1
        %s417 = smul.addr %s416, 6
        %s418 = smul.addr %s417, 8
        %s419 = scalar_lea.vmem %s0, %s418
        %v420 = vld [vmem:[%s419] sm:$0xff]
        %v421 = vld [vmem:[%s419 + $0x8] sm:$0xff]
        %v422 = vld [vmem:[%s419 + $0x10] sm:$0xff]
        %v423 = vld [vmem:[%s419 + $0x18] sm:$0xff]
        %v424 = vld [vmem:[%s419 + $0x20] sm:$0x3f]
        %v425 = vld [vmem:[%s419 + $0x28] sm:$0x3f]
        %v426 = vld [vmem:[#allocation5] sm:$0xff]
        %v427 = vld [vmem:[#allocation5 + $0x8] sm:$0xff]
        %v428 = vld [vmem:[#allocation5 + $0x10] sm:$0xff]
        %v429 = vld [vmem:[#allocation5 + $0x18] sm:$0xff]
        %v430 = vld [vmem:[#allocation5 + $0x20] sm:$0x3f]
        %v431 = vld [vmem:[#allocation5 + $0x28] sm:$0x3f]
        %v432 = vmul.f32 %v420, %v426
        %v433 = vmul.f32 %v421, %v427
        %v434 = vmul.f32 %v422, %v428
        %v435 = vmul.f32 %v423, %v429
        %v436 = vmul.f32 %v424, %v430
        %v437 = vmul.f32 %v425, %v431
        %v438 = vld [vmem:[#allocation10] sm:$0xff]
        %v439 = vld [vmem:[#allocation10 + $0x8] sm:$0xff]
        %v440 = vld [vmem:[#allocation10 + $0x10] sm:$0xff]
        %v441 = vld [vmem:[#allocation10 + $0x18] sm:$0xff]
        %v442 = vld [vmem:[#allocation10 + $0x20] sm:$0x3f]
        %v443 = vld [vmem:[#allocation10 + $0x28] sm:$0x3f]
        %v444 = vadd.f32 %v432, %v438
        %v445 = vadd.f32 %v433, %v439
        %v446 = vadd.f32 %v434, %v440
        %v447 = vadd.f32 %v435, %v441
        %v448 = vadd.f32 %v436, %v442
        %v449 = vadd.f32 %v437, %v443
        %v450 = vmax.f32 %v444, 0.0
        %v451 = vmax.f32 %v445, 0.0
        %v452 = vmax.f32 %v446, 0.0
        %v453 = vmax.f32 %v447, 0.0
        %v454 = vmax.f32 %v448, 0.0
        %v455 = vmax.f32 %v449, 0.0
        %v456 = vld [vmem:[#allocation2] sm:$0xff]
        %v457 = vld [vmem:[#allocation2 + $0x8] sm:$0xff]
        %v458 = vld [vmem:[#allocation2 + $0x10] sm:$0xff]
        %v459 = vld [vmem:[#allocation2 + $0x18] sm:$0xff]
        %v460 = vld [vmem:[#allocation2 + $0x20] sm:$0xff]
        %v461 = vld [vmem:[#allocation2 + $0x28] sm:$0xff]
        %v462 = vld [vmem:[#allocation2 + $0x30] sm:$0xff]
        %v463 = vld [vmem:[#allocation2 + $0x38] sm:$0xff]
        %v464 = vld [vmem:[#allocation2 + $0x40] sm:$0xff]
        %v465 = vld [vmem:[#allocation2 + $0x48] sm:$0xff]
        %v466 = vld [vmem:[#allocation2 + $0x50] sm:$0xff]
        %v467 = vld [vmem:[#allocation2 + $0x58] sm:$0xff]
        %v468 = vld [vmem:[#allocation2 + $0x60] sm:$0xff]
        %v469 = vld [vmem:[#allocation2 + $0x68] sm:$0xff]
        %v470 = vld [vmem:[#allocation2 + $0x70] sm:$0xff]
        %v471 = vld [vmem:[#allocation2 + $0x78] sm:$0xff]
        %v472 = vld [vmem:[#allocation2 + $0x80] sm:$0xff]
        %v473 = vld [vmem:[#allocation2 + $0x88] sm:$0xff]
        %v474 = vld [vmem:[#allocation2 + $0x90] sm:$0xff]
        %v475 = vld [vmem:[#allocation2 + $0x98] sm:$0xff]
        %v476 = vld [vmem:[#allocation2 + $0xa0] sm:$0xff]
        %v477 = vld [vmem:[#allocation2 + $0xa8] sm:$0xff]
        %v478 = vld [vmem:[#allocation2 + $0xb0] sm:$0xff]
        %v479 = vld [vmem:[#allocation2 + $0xb8] sm:$0xff]
        %v480 = vld [vmem:[#allocation2 + $0xc0] sm:$0xff]
        %v481 = vld [vmem:[#allocation2 + $0xc8] sm:$0xff]
        %v482 = vld [vmem:[#allocation2 + $0xd0] sm:$0xff]
        %v483 = vld [vmem:[#allocation2 + $0xd8] sm:$0xff]
        %v484 = vld [vmem:[#allocation2 + $0xe0] sm:$0xff]
        %v485 = vld [vmem:[#allocation2 + $0xe8] sm:$0xff]
        %v486 = vld [vmem:[#allocation2 + $0xf0] sm:$0xff]
        %v487 = vld [vmem:[#allocation2 + $0xf8] sm:$0xff]
        %v488 = vld [vmem:[#allocation2 + $0x100] sm:$0xff]
        %v489 = vld [vmem:[#allocation2 + $0x108] sm:$0xff]
        %v490 = vld [vmem:[#allocation2 + $0x110] sm:$0xff]
        %v491 = vld [vmem:[#allocation2 + $0x118] sm:$0xff]
        %s492 = scalar_lea.vmem [#allocation2], 288
        %v493 = vld [vmem:[%s492] sm:$0xff]
        %v494 = vld [vmem:[%s492 + $0x8] sm:$0xff]
        %v495 = vld [vmem:[%s492 + $0x10] sm:$0xff]
        %v496 = vld [vmem:[%s492 + $0x18] sm:$0xff]
        %v497 = vld [vmem:[%s492 + $0x20] sm:$0xff]
        %v498 = vld [vmem:[%s492 + $0x28] sm:$0xff]
        %v499 = vld [vmem:[%s492 + $0x30] sm:$0xff]
        %v500 = vld [vmem:[%s492 + $0x38] sm:$0xff]
        %v501 = vld [vmem:[%s492 + $0x40] sm:$0xff]
        %v502 = vld [vmem:[%s492 + $0x48] sm:$0xff]
        %v503 = vld [vmem:[%s492 + $0x50] sm:$0xff]
        %v504 = vld [vmem:[%s492 + $0x58] sm:$0xff]
        %v505 = vld [vmem:[%s492 + $0x60] sm:$0xff]
        %v506 = vld [vmem:[%s492 + $0x68] sm:$0xff]
        %v507 = vld [vmem:[%s492 + $0x70] sm:$0xff]
        %v508 = vld [vmem:[%s492 + $0x78] sm:$0xff]
        %v509 = vld [vmem:[%s492 + $0x80] sm:$0xff]
        %v510 = vld [vmem:[%s492 + $0x88] sm:$0xff]
        %v511 = vld [vmem:[%s492 + $0x90] sm:$0xff]
        %v512 = vld [vmem:[%s492 + $0x98] sm:$0xff]
        %v513 = vld [vmem:[%s492 + $0xa0] sm:$0xff]
        %v514 = vld [vmem:[%s492 + $0xa8] sm:$0xff]
        %v515 = vld [vmem:[%s492 + $0xb0] sm:$0xff]
        %v516 = vld [vmem:[%s492 + $0xb8] sm:$0xff]
        %v517 = vld [vmem:[%s492 + $0xc0] sm:$0xff]
        %v518 = vld [vmem:[%s492 + $0xc8] sm:$0xff]
        %v519 = vld [vmem:[%s492 + $0xd0] sm:$0xff]
        %v520 = vld [vmem:[%s492 + $0xd8] sm:$0xff]
        %v521 = vld [vmem:[%s492 + $0xe0] sm:$0xff]
        %v522 = vld [vmem:[%s492 + $0xe8] sm:$0xff]
        %v523 = vld [vmem:[%s492 + $0xf0] sm:$0xff]
        %v524 = vld [vmem:[%s492 + $0xf8] sm:$0xff]
        %v525 = vld [vmem:[%s492 + $0x100] sm:$0xff]
        %v526 = vld [vmem:[%s492 + $0x108] sm:$0xff]
        %v527 = vld [vmem:[%s492 + $0x110] sm:$0xff]
        %v528 = vld [vmem:[%s492 + $0x118] sm:$0xff]
        %vm535 = vcmask 1046528
        %v536 = vrot.slane %v450, 1
        %v537 = vrot.slane %v452, 1
        %v538 = vsel %vm535, %v536, %v537
        %v539 = vrot.slane %v451, 1
        %v540 = vrot.slane %v453, 1
        %v541 = vsel %vm535, %v539, %v540
        %v542 = vrot.slane %v454, 1
        %v543 = vsel %vm535, %v537, %v542
        %v544 = vrot.slane %v455, 1
        %v545 = vsel %vm535, %v540, %v544
        %vm549 = vcmask 130048
        %v550 = vsel %vm549, %v541, 0
        %v552 = vsel %vm549, %v545, 0
        %v554 = vsel %vm549, %v544, 0
        %556 = vmatpush.msra.mxu0 %v523
        %557 = vmatpush.msra.mxu0 %v521
        %558 = vmatpush.msra.mxu0 %v519
        %559 = vmatpush.msra.mxu0 %v517
        %560 = vmatpush.msra.mxu0 %v515
        %561 = vmatpush.msra.mxu0 %v513
        %562 = vmatpush.msra.mxu0 %v511
        %563 = vmatpush.msra.mxu0 %v509
        %564 = vmatpush.msra.mxu0 %v507
        %565 = vmatpush.msra.mxu0 %v505
        %566 = vmatpush.msra.mxu0 %v503
        %567 = vmatpush.msra.mxu0 %v501
        %568 = vmatpush.msra.mxu0 %v499
        %569 = vmatpush.msra.mxu0 %v497
        %570 = vmatpush.msra.mxu0 %v495
        %571 = vmatpush.msra.mxu0 %v493
        %572 = vmatmul.f32.gmra.mxu0 %v538
        %v573 = vpop.f32.mrf.mxu0
        %v574 = vadd.f32 0.0, %v573
        %575 = vmatmul.f32.gmra.mxu0 %v543
        %v576 = vpop.f32.mrf.mxu0
        %v577 = vadd.f32 0.0, %v576
        %578 = vmatmul.f32.gmra.mxu0 %v542
        %v579 = vpop.f32.mrf.mxu0
        %v580 = vadd.f32 0.0, %v579
        %581 = vdwg.mxu0
        %582 = vmatpush.msra.mxu0 0.0
        %583 = vmatpush.msra.mxu0 0.0
        %584 = vmatpush.msra.mxu0 0.0
        %585 = vmatpush.msra.mxu0 0.0
        %586 = vmatpush.msra.mxu0 0.0
        %587 = vmatpush.msra.mxu0 0.0
        %588 = vmatpush.msra.mxu0 0.0
        %589 = vmatpush.msra.mxu0 0.0
        %590 = vmatpush.msra.mxu0 0.0
        %591 = vmatpush.msra.mxu0 0.0
        %592 = vmatpush.msra.mxu0 0.0
        %593 = vmatpush.msra.mxu0 0.0
        %594 = vmatpush.msra.mxu0 0.0
        %595 = vmatpush.msra.mxu0 0.0
        %596 = vmatpush.msra.mxu0 %v527
        %597 = vmatpush.msra.mxu0 %v525
        %598 = vmatmul.f32.gmra.mxu0 %v550
        %v599 = vpop.f32.mrf.mxu0
        %v600 = vadd.f32 %v574, %v599
        %601 = vmatmul.f32.gmra.mxu0 %v552
        %v602 = vpop.f32.mrf.mxu0
        %v603 = vadd.f32 %v577, %v602
        %604 = vmatmul.f32.gmra.mxu0 %v554
        %v605 = vpop.f32.mrf.mxu0
        %v606 = vadd.f32 %v580, %v605
        %607 = vdwg.mxu0
        %608 = vmatpush.msra.mxu0 %v524
        %609 = vmatpush.msra.mxu0 %v522
        %610 = vmatpush.msra.mxu0 %v520
        %611 = vmatpush.msra.mxu0 %v518
        %612 = vmatpush.msra.mxu0 %v516
        %613 = vmatpush.msra.mxu0 %v514
        %614 = vmatpush.msra.mxu0 %v512
        %615 = vmatpush.msra.mxu0 %v510
        %616 = vmatpush.msra.mxu0 %v508
        %617 = vmatpush.msra.mxu0 %v506
        %618 = vmatpush.msra.mxu0 %v504
        %619 = vmatpush.msra.mxu0 %v502
        %620 = vmatpush.msra.mxu0 %v500
        %621 = vmatpush.msra.mxu0 %v498
        %622 = vmatpush.msra.mxu0 %v496
        %623 = vmatpush.msra.mxu0 %v494
        %624 = vmatmul.f32.gmra.mxu0 %v538
        %v625 = vpop.f32.mrf.mxu0
        %v626 = vadd.f32 0.0, %v625
        %627 = vmatmul.f32.gmra.mxu0 %v543
        %v628 = vpop.f32.mrf.mxu0
        %v629 = vadd.f32 0.0, %v628
        %630 = vmatmul.f32.gmra.mxu0 %v542
        %v631 = vpop.f32.mrf.mxu0
        %v632 = vadd.f32 0.0, %v631
        %633 = vdwg.mxu0
        %634 = vmatpush.msra.mxu0 0.0
        %635 = vmatpush.msra.mxu0 0.0
        %636 = vmatpush.msra.mxu0 0.0
        %637 = vmatpush.msra.mxu0 0.0
        %638 = vmatpush.msra.mxu0 0.0
        %639 = vmatpush.msra.mxu0 0.0
        %640 = vmatpush.msra.mxu0 0.0
        %641 = vmatpush.msra.mxu0 0.0
        %642 = vmatpush.msra.mxu0 0.0
        %643 = vmatpush.msra.mxu0 0.0
        %644 = vmatpush.msra.mxu0 0.0
        %645 = vmatpush.msra.mxu0 0.0
        %646 = vmatpush.msra.mxu0 0.0
        %647 = vmatpush.msra.mxu0 0.0
        %648 = vmatpush.msra.mxu0 %v528
        %649 = vmatpush.msra.mxu0 %v526
        %650 = vmatmul.f32.gmra.mxu0 %v550
        %v651 = vpop.f32.mrf.mxu0
        %v652 = vadd.f32 %v626, %v651
        %653 = vmatmul.f32.gmra.mxu0 %v552
        %v654 = vpop.f32.mrf.mxu0
        %v655 = vadd.f32 %v629, %v654
        %656 = vmatmul.f32.gmra.mxu0 %v554
        %v657 = vpop.f32.mrf.mxu0
        %v658 = vadd.f32 %v632, %v657
        %659 = vdwg.mxu0
        %v660 = vsel %vm549, %v451, 0
        %v662 = vsel %vm549, %v453, 0
        %v664 = vsel %vm549, %v455, 0
        %666 = vmatpush.msra.mxu0 %v486
        %667 = vmatpush.msra.mxu0 %v484
        %668 = vmatpush.msra.mxu0 %v482
        %669 = vmatpush.msra.mxu0 %v480
        %670 = vmatpush.msra.mxu0 %v478
        %671 = vmatpush.msra.mxu0 %v476
        %672 = vmatpush.msra.mxu0 %v474
        %673 = vmatpush.msra.mxu0 %v472
        %674 = vmatpush.msra.mxu0 %v470
        %675 = vmatpush.msra.mxu0 %v468
        %676 = vmatpush.msra.mxu0 %v466
        %677 = vmatpush.msra.mxu0 %v464
        %678 = vmatpush.msra.mxu0 %v462
        %679 = vmatpush.msra.mxu0 %v460
        %680 = vmatpush.msra.mxu0 %v458
        %681 = vmatpush.msra.mxu0 %v456
        %682 = vmatmul.f32.gmra.mxu0 %v450
        %v683 = vpop.f32.mrf.mxu0
        %v684 = vadd.f32 %v600, %v683
        %685 = vmatmul.f32.gmra.mxu0 %v452
        %v686 = vpop.f32.mrf.mxu0
        %v687 = vadd.f32 %v603, %v686
        %688 = vmatmul.f32.gmra.mxu0 %v454
        %v689 = vpop.f32.mrf.mxu0
        %v690 = vadd.f32 %v606, %v689
        %691 = vdwg.mxu0
        %692 = vmatpush.msra.mxu0 0.0
        %693 = vmatpush.msra.mxu0 0.0
        %694 = vmatpush.msra.mxu0 0.0
        %695 = vmatpush.msra.mxu0 0.0
        %696 = vmatpush.msra.mxu0 0.0
        %697 = vmatpush.msra.mxu0 0.0
        %698 = vmatpush.msra.mxu0 0.0
        %699 = vmatpush.msra.mxu0 0.0
        %700 = vmatpush.msra.mxu0 0.0
        %701 = vmatpush.msra.mxu0 0.0
        %702 = vmatpush.msra.mxu0 0.0
        %703 = vmatpush.msra.mxu0 0.0
        %704 = vmatpush.msra.mxu0 0.0
        %705 = vmatpush.msra.mxu0 0.0
        %706 = vmatpush.msra.mxu0 %v490
        %707 = vmatpush.msra.mxu0 %v488
        %708 = vmatmul.f32.gmra.mxu0 %v660
        %v709 = vpop.f32.mrf.mxu0
        %v710 = vadd.f32 %v684, %v709
        %711 = vmatmul.f32.gmra.mxu0 %v662
        %v712 = vpop.f32.mrf.mxu0
        %v713 = vadd.f32 %v687, %v712
        %714 = vmatmul.f32.gmra.mxu0 %v664
        %v715 = vpop.f32.mrf.mxu0
        %v716 = vadd.f32 %v690, %v715
        %717 = vdwg.mxu0
        %718 = vmatpush.msra.mxu0 %v487
        %719 = vmatpush.msra.mxu0 %v485
        %720 = vmatpush.msra.mxu0 %v483
        %721 = vmatpush.msra.mxu0 %v481
        %722 = vmatpush.msra.mxu0 %v479
        %723 = vmatpush.msra.mxu0 %v477
        %724 = vmatpush.msra.mxu0 %v475
        %725 = vmatpush.msra.mxu0 %v473
        %726 = vmatpush.msra.mxu0 %v471
        %727 = vmatpush.msra.mxu0 %v469
        %728 = vmatpush.msra.mxu0 %v467
        %729 = vmatpush.msra.mxu0 %v465
        %730 = vmatpush.msra.mxu0 %v463
        %731 = vmatpush.msra.mxu0 %v461
        %732 = vmatpush.msra.mxu0 %v459
        %733 = vmatpush.msra.mxu0 %v457
        %734 = vmatmul.f32.gmra.mxu0 %v450
        %v735 = vpop.f32.mrf.mxu0
        %v736 = vadd.f32 %v652, %v735
        %737 = vmatmul.f32.gmra.mxu0 %v452
        %v738 = vpop.f32.mrf.mxu0
        %v739 = vadd.f32 %v655, %v738
        %740 = vmatmul.f32.gmra.mxu0 %v454
        %v741 = vpop.f32.mrf.mxu0
        %v742 = vadd.f32 %v658, %v741
        %743 = vdwg.mxu0
        %744 = vmatpush.msra.mxu0 0.0
        %745 = vmatpush.msra.mxu0 0.0
        %746 = vmatpush.msra.mxu0 0.0
        %747 = vmatpush.msra.mxu0 0.0
        %748 = vmatpush.msra.mxu0 0.0
        %749 = vmatpush.msra.mxu0 0.0
        %750 = vmatpush.msra.mxu0 0.0
        %751 = vmatpush.msra.mxu0 0.0
        %752 = vmatpush.msra.mxu0 0.0
        %753 = vmatpush.msra.mxu0 0.0
        %754 = vmatpush.msra.mxu0 0.0
        %755 = vmatpush.msra.mxu0 0.0
        %756 = vmatpush.msra.mxu0 0.0
        %757 = vmatpush.msra.mxu0 0.0
        %758 = vmatpush.msra.mxu0 %v491
        %759 = vmatpush.msra.mxu0 %v489
        %760 = vmatmul.f32.gmra.mxu0 %v660
        %v761 = vpop.f32.mrf.mxu0
        %v762 = vadd.f32 %v736, %v761
        %763 = vmatmul.f32.gmra.mxu0 %v662
        %v764 = vpop.f32.mrf.mxu0
        %v765 = vadd.f32 %v739, %v764
        %766 = vmatmul.f32.gmra.mxu0 %v664
        %v767 = vpop.f32.mrf.mxu0
        %v768 = vadd.f32 %v742, %v767
        %769 = vdwg.mxu0
        %s770 = scalar_lea.vmem [#allocation2], 576
        %v771 = vld [vmem:[%s770] sm:$0xff]
        %v772 = vld [vmem:[%s770 + $0x8] sm:$0xff]
        %v773 = vld [vmem:[%s770 + $0x10] sm:$0xff]
        %v774 = vld [vmem:[%s770 + $0x18] sm:$0xff]
        %v775 = vld [vmem:[%s770 + $0x20] sm:$0xff]
        %v776 = vld [vmem:[%s770 + $0x28] sm:$0xff]
        %v777 = vld [vmem:[%s770 + $0x30] sm:$0xff]
        %v778 = vld [vmem:[%s770 + $0x38] sm:$0xff]
        %v779 = vld [vmem:[%s770 + $0x40] sm:$0xff]
        %v780 = vld [vmem:[%s770 + $0x48] sm:$0xff]
        %v781 = vld [vmem:[%s770 + $0x50] sm:$0xff]
        %v782 = vld [vmem:[%s770 + $0x58] sm:$0xff]
        %v783 = vld [vmem:[%s770 + $0x60] sm:$0xff]
        %v784 = vld [vmem:[%s770 + $0x68] sm:$0xff]
        %v785 = vld [vmem:[%s770 + $0x70] sm:$0xff]
        %v786 = vld [vmem:[%s770 + $0x78] sm:$0xff]
        %v787 = vld [vmem:[%s770 + $0x80] sm:$0xff]
        %v788 = vld [vmem:[%s770 + $0x88] sm:$0xff]
        %v789 = vld [vmem:[%s770 + $0x90] sm:$0xff]
        %v790 = vld [vmem:[%s770 + $0x98] sm:$0xff]
        %v791 = vld [vmem:[%s770 + $0xa0] sm:$0xff]
        %v792 = vld [vmem:[%s770 + $0xa8] sm:$0xff]
        %v793 = vld [vmem:[%s770 + $0xb0] sm:$0xff]
        %v794 = vld [vmem:[%s770 + $0xb8] sm:$0xff]
        %v795 = vld [vmem:[%s770 + $0xc0] sm:$0xff]
        %v796 = vld [vmem:[%s770 + $0xc8] sm:$0xff]
        %v797 = vld [vmem:[%s770 + $0xd0] sm:$0xff]
        %v798 = vld [vmem:[%s770 + $0xd8] sm:$0xff]
        %v799 = vld [vmem:[%s770 + $0xe0] sm:$0xff]
        %v800 = vld [vmem:[%s770 + $0xe8] sm:$0xff]
        %v801 = vld [vmem:[%s770 + $0xf0] sm:$0xff]
        %v802 = vld [vmem:[%s770 + $0xf8] sm:$0xff]
        %v803 = vld [vmem:[%s770 + $0x100] sm:$0xff]
        %v804 = vld [vmem:[%s770 + $0x108] sm:$0xff]
        %v805 = vld [vmem:[%s770 + $0x110] sm:$0xff]
        %v806 = vld [vmem:[%s770 + $0x118] sm:$0xff]
        %vm807 = vcmask 1045504
        %v808 = vrot.slane %v450, 2
        %v809 = vrot.slane %v452, 2
        %v810 = vsel %vm807, %v808, %v809
        %v811 = vrot.slane %v451, 2
        %v812 = vrot.slane %v453, 2
        %v813 = vsel %vm807, %v811, %v812
        %v814 = vrot.slane %v454, 2
        %v815 = vsel %vm807, %v809, %v814
        %v816 = vrot.slane %v455, 2
        %v817 = vsel %vm807, %v812, %v816
        %v821 = vsel %vm549, %v813, 0
        %v823 = vsel %vm549, %v817, 0
        %v825 = vsel %vm549, %v816, 0
        %827 = vmatpush.msra.mxu0 %v801
        %828 = vmatpush.msra.mxu0 %v799
        %829 = vmatpush.msra.mxu0 %v797
        %830 = vmatpush.msra.mxu0 %v795
        %831 = vmatpush.msra.mxu0 %v793
        %832 = vmatpush.msra.mxu0 %v791
        %833 = vmatpush.msra.mxu0 %v789
        %834 = vmatpush.msra.mxu0 %v787
        %835 = vmatpush.msra.mxu0 %v785
        %836 = vmatpush.msra.mxu0 %v783
        %837 = vmatpush.msra.mxu0 %v781
        %838 = vmatpush.msra.mxu0 %v779
        %839 = vmatpush.msra.mxu0 %v777
        %840 = vmatpush.msra.mxu0 %v775
        %841 = vmatpush.msra.mxu0 %v773
        %842 = vmatpush.msra.mxu0 %v771
        %843 = vmatmul.f32.gmra.mxu0 %v810
        %v844 = vpop.f32.mrf.mxu0
        %v845 = vadd.f32 0.0, %v844
        %846 = vmatmul.f32.gmra.mxu0 %v815
        %v847 = vpop.f32.mrf.mxu0
        %v848 = vadd.f32 0.0, %v847
        %849 = vmatmul.f32.gmra.mxu0 %v814
        %v850 = vpop.f32.mrf.mxu0
        %v851 = vadd.f32 0.0, %v850
        %852 = vdwg.mxu0
        %853 = vmatpush.msra.mxu0 0.0
        %854 = vmatpush.msra.mxu0 0.0
        %855 = vmatpush.msra.mxu0 0.0
        %856 = vmatpush.msra.mxu0 0.0
        %857 = vmatpush.msra.mxu0 0.0
        %858 = vmatpush.msra.mxu0 0.0
        %859 = vmatpush.msra.mxu0 0.0
        %860 = vmatpush.msra.mxu0 0.0
        %861 = vmatpush.msra.mxu0 0.0
        %862 = vmatpush.msra.mxu0 0.0
        %863 = vmatpush.msra.mxu0 0.0
        %864 = vmatpush.msra.mxu0 0.0
        %865 = vmatpush.msra.mxu0 0.0
        %866 = vmatpush.msra.mxu0 0.0
        %867 = vmatpush.msra.mxu0 %v805
        %868 = vmatpush.msra.mxu0 %v803
        %869 = vmatmul.f32.gmra.mxu0 %v821
        %v870 = vpop.f32.mrf.mxu0
        %v871 = vadd.f32 %v845, %v870
        %872 = vmatmul.f32.gmra.mxu0 %v823
        %v873 = vpop.f32.mrf.mxu0
        %v874 = vadd.f32 %v848, %v873
        %875 = vmatmul.f32.gmra.mxu0 %v825
        %v876 = vpop.f32.mrf.mxu0
        %v877 = vadd.f32 %v851, %v876
        %878 = vdwg.mxu0
        %879 = vmatpush.msra.mxu0 %v802
        %880 = vmatpush.msra.mxu0 %v800
        %881 = vmatpush.msra.mxu0 %v798
        %882 = vmatpush.msra.mxu0 %v796
        %883 = vmatpush.msra.mxu0 %v794
        %884 = vmatpush.msra.mxu0 %v792
        %885 = vmatpush.msra.mxu0 %v790
        %886 = vmatpush.msra.mxu0 %v788
        %887 = vmatpush.msra.mxu0 %v786
        %888 = vmatpush.msra.mxu0 %v784
        %889 = vmatpush.msra.mxu0 %v782
        %890 = vmatpush.msra.mxu0 %v780
        %891 = vmatpush.msra.mxu0 %v778
        %892 = vmatpush.msra.mxu0 %v776
        %893 = vmatpush.msra.mxu0 %v774
        %894 = vmatpush.msra.mxu0 %v772
        %895 = vmatmul.f32.gmra.mxu0 %v810
        %v896 = vpop.f32.mrf.mxu0
        %v897 = vadd.f32 0.0, %v896
        %898 = vmatmul.f32.gmra.mxu0 %v815
        %v899 = vpop.f32.mrf.mxu0
        %v900 = vadd.f32 0.0, %v899
        %901 = vmatmul.f32.gmra.mxu0 %v814
        %v902 = vpop.f32.mrf.mxu0
        %v903 = vadd.f32 0.0, %v902
        %904 = vdwg.mxu0
        %905 = vmatpush.msra.mxu0 0.0
        %906 = vmatpush.msra.mxu0 0.0
        %907 = vmatpush.msra.mxu0 0.0
        %908 = vmatpush.msra.mxu0 0.0
        %909 = vmatpush.msra.mxu0 0.0
        %910 = vmatpush.msra.mxu0 0.0
        %911 = vmatpush.msra.mxu0 0.0
        %912 = vmatpush.msra.mxu0 0.0
        %913 = vmatpush.msra.mxu0 0.0
        %914 = vmatpush.msra.mxu0 0.0
        %915 = vmatpush.msra.mxu0 0.0
        %916 = vmatpush.msra.mxu0 0.0
        %917 = vmatpush.msra.mxu0 0.0
        %918 = vmatpush.msra.mxu0 0.0
        %919 = vmatpush.msra.mxu0 %v806
        %920 = vmatpush.msra.mxu0 %v804
        %921 = vmatmul.f32.gmra.mxu0 %v821
        %v922 = vpop.f32.mrf.mxu0
        %v923 = vadd.f32 %v897, %v922
        %924 = vmatmul.f32.gmra.mxu0 %v823
        %v925 = vpop.f32.mrf.mxu0
        %v926 = vadd.f32 %v900, %v925
        %927 = vmatmul.f32.gmra.mxu0 %v825
        %v928 = vpop.f32.mrf.mxu0
        %v929 = vadd.f32 %v903, %v928
        %930 = vdwg.mxu0
        %v931 = vadd.f32 %v710, %v871
        %v932 = vadd.f32 %v762, %v923
        %v933 = vadd.f32 %v713, %v874
        %v934 = vadd.f32 %v765, %v926
        %v935 = vadd.f32 %v716, %v877
        %v936 = vadd.f32 %v768, %v929
        %v937 = vld [vmem:[#allocation7] sm:$0xff]
        %v938 = vld [vmem:[#allocation7 + $0x8] sm:$0xff]
        %v939 = vld [vmem:[#allocation7 + $0x10] sm:$0xff]
        %v940 = vld [vmem:[#allocation7 + $0x18] sm:$0xff]
        %v941 = vld [vmem:[#allocation7 + $0x20] sm:$0xf]
        %v942 = vld [vmem:[#allocation7 + $0x28] sm:$0xf]
        %v943 = vmul.f32 %v931, %v937
        %v944 = vmul.f32 %v932, %v938
        %v945 = vmul.f32 %v933, %v939
        %v946 = vmul.f32 %v934, %v940
        %v947 = vmul.f32 %v935, %v941
        %v948 = vmul.f32 %v936, %v942
        %v949 = vld [vmem:[#allocation11] sm:$0xff]
        %v950 = vld [vmem:[#allocation11 + $0x8] sm:$0xff]
        %v951 = vld [vmem:[#allocation11 + $0x10] sm:$0xff]
        %v952 = vld [vmem:[#allocation11 + $0x18] sm:$0xff]
        %v953 = vld [vmem:[#allocation11 + $0x20] sm:$0xf]
        %v954 = vld [vmem:[#allocation11 + $0x28] sm:$0xf]
        %v955 = vadd.f32 %v943, %v949
        %v956 = vadd.f32 %v944, %v950
        %v957 = vadd.f32 %v945, %v951
        %v958 = vadd.f32 %v946, %v952
        %v959 = vadd.f32 %v947, %v953
        %v960 = vadd.f32 %v948, %v954
        %v961 = vmax.f32 %v955, 0.0
        %v962 = vmax.f32 %v956, 0.0
        %v963 = vmax.f32 %v957, 0.0
        %v964 = vmax.f32 %v958, 0.0
        %v965 = vmax.f32 %v959, 0.0
        %v966 = vmax.f32 %v960, 0.0
        %s967 = scalar_lea.vmem [#allocation2], 864
        %v968 = vld [vmem:[%s967] sm:$0xff]
        %v969 = vld [vmem:[%s967 + $0x8] sm:$0xff]
        %v970 = vld [vmem:[%s967 + $0x10] sm:$0xff]
        %v971 = vld [vmem:[%s967 + $0x18] sm:$0xff]
        %v972 = vld [vmem:[%s967 + $0x20] sm:$0xff]
        %v973 = vld [vmem:[%s967 + $0x28] sm:$0xff]
        %v974 = vld [vmem:[%s967 + $0x30] sm:$0xff]
        %v975 = vld [vmem:[%s967 + $0x38] sm:$0xff]
        %v976 = vld [vmem:[%s967 + $0x40] sm:$0xff]
        %v977 = vld [vmem:[%s967 + $0x48] sm:$0xff]
        %v978 = vld [vmem:[%s967 + $0x50] sm:$0xff]
        %v979 = vld [vmem:[%s967 + $0x58] sm:$0xff]
        %v980 = vld [vmem:[%s967 + $0x60] sm:$0xff]
        %v981 = vld [vmem:[%s967 + $0x68] sm:$0xff]
        %v982 = vld [vmem:[%s967 + $0x70] sm:$0xff]
        %v983 = vld [vmem:[%s967 + $0x78] sm:$0xff]
        %v984 = vld [vmem:[%s967 + $0x80] sm:$0xff]
        %v985 = vld [vmem:[%s967 + $0x88] sm:$0xff]
        %v986 = vld [vmem:[%s967 + $0x90] sm:$0xff]
        %v987 = vld [vmem:[%s967 + $0x98] sm:$0xff]
        %v988 = vld [vmem:[%s967 + $0xa0] sm:$0xff]
        %v989 = vld [vmem:[%s967 + $0xa8] sm:$0xff]
        %v990 = vld [vmem:[%s967 + $0xb0] sm:$0xff]
        %v991 = vld [vmem:[%s967 + $0xb8] sm:$0xff]
        %v992 = vld [vmem:[%s967 + $0xc0] sm:$0xff]
        %v993 = vld [vmem:[%s967 + $0xc8] sm:$0xff]
        %v994 = vld [vmem:[%s967 + $0xd0] sm:$0xff]
        %v995 = vld [vmem:[%s967 + $0xd8] sm:$0xff]
        %v996 = vld [vmem:[%s967 + $0xe0] sm:$0xff]
        %v997 = vld [vmem:[%s967 + $0xe8] sm:$0xff]
        %v998 = vld [vmem:[%s967 + $0xf0] sm:$0xff]
        %v999 = vld [vmem:[%s967 + $0xf8] sm:$0xff]
        %v1000 = vld [vmem:[%s967 + $0x100] sm:$0xff]
        %v1001 = vld [vmem:[%s967 + $0x108] sm:$0xff]
        %v1002 = vld [vmem:[%s967 + $0x110] sm:$0xff]
        %v1003 = vld [vmem:[%s967 + $0x118] sm:$0xff]
        %s1004 = scalar_lea.vmem [#allocation2], 1152
        %v1005 = vld [vmem:[%s1004] sm:$0xff]
        %v1006 = vld [vmem:[%s1004 + $0x8] sm:$0xff]
        %v1007 = vld [vmem:[%s1004 + $0x10] sm:$0xff]
        %v1008 = vld [vmem:[%s1004 + $0x18] sm:$0xff]
        %v1009 = vld [vmem:[%s1004 + $0x20] sm:$0xff]
        %v1010 = vld [vmem:[%s1004 + $0x28] sm:$0xff]
        %v1011 = vld [vmem:[%s1004 + $0x30] sm:$0xff]
        %v1012 = vld [vmem:[%s1004 + $0x38] sm:$0xff]
        %v1013 = vld [vmem:[%s1004 + $0x40] sm:$0xff]
        %v1014 = vld [vmem:[%s1004 + $0x48] sm:$0xff]
        %v1015 = vld [vmem:[%s1004 + $0x50] sm:$0xff]
        %v1016 = vld [vmem:[%s1004 + $0x58] sm:$0xff]
        %v1017 = vld [vmem:[%s1004 + $0x60] sm:$0xff]
        %v1018 = vld [vmem:[%s1004 + $0x68] sm:$0xff]
        %v1019 = vld [vmem:[%s1004 + $0x70] sm:$0xff]
        %v1020 = vld [vmem:[%s1004 + $0x78] sm:$0xff]
        %v1021 = vld [vmem:[%s1004 + $0x80] sm:$0xff]
        %v1022 = vld [vmem:[%s1004 + $0x88] sm:$0xff]
        %v1023 = vld [vmem:[%s1004 + $0x90] sm:$0xff]
        %v1024 = vld [vmem:[%s1004 + $0x98] sm:$0xff]
        %v1025 = vld [vmem:[%s1004 + $0xa0] sm:$0xff]
        %v1026 = vld [vmem:[%s1004 + $0xa8] sm:$0xff]
        %v1027 = vld [vmem:[%s1004 + $0xb0] sm:$0xff]
        %v1028 = vld [vmem:[%s1004 + $0xb8] sm:$0xff]
        %v1029 = vld [vmem:[%s1004 + $0xc0] sm:$0xff]
        %v1030 = vld [vmem:[%s1004 + $0xc8] sm:$0xff]
        %v1031 = vld [vmem:[%s1004 + $0xd0] sm:$0xff]
        %v1032 = vld [vmem:[%s1004 + $0xd8] sm:$0xff]
        %v1033 = vld [vmem:[%s1004 + $0xe0] sm:$0xff]
        %v1034 = vld [vmem:[%s1004 + $0xe8] sm:$0xff]
        %v1035 = vld [vmem:[%s1004 + $0xf0] sm:$0xff]
        %v1036 = vld [vmem:[%s1004 + $0xf8] sm:$0xff]
        %v1037 = vld [vmem:[%s1004 + $0x100] sm:$0xff]
        %v1038 = vld [vmem:[%s1004 + $0x108] sm:$0xff]
        %v1039 = vld [vmem:[%s1004 + $0x110] sm:$0xff]
        %v1040 = vld [vmem:[%s1004 + $0x118] sm:$0xff]
        %v1047 = vrot.slane %v961, 1
        %v1048 = vrot.slane %v963, 1
        %v1049 = vsel %vm535, %v1047, %v1048
        %v1050 = vrot.slane %v962, 1
        %v1051 = vrot.slane %v964, 1
        %v1052 = vsel %vm535, %v1050, %v1051
        %v1053 = vrot.slane %v965, 1
        %v1054 = vsel %vm535, %v1048, %v1053
        %v1055 = vrot.slane %v966, 1
        %v1056 = vsel %vm535, %v1051, %v1055
        %v1060 = vsel %vm549, %v1052, 0
        %v1062 = vsel %vm549, %v1056, 0
        %v1064 = vsel %vm549, %v1055, 0
        %1066 = vmatpush.msra.mxu0 %v1035
        %1067 = vmatpush.msra.mxu0 %v1033
        %1068 = vmatpush.msra.mxu0 %v1031
        %1069 = vmatpush.msra.mxu0 %v1029
        %1070 = vmatpush.msra.mxu0 %v1027
        %1071 = vmatpush.msra.mxu0 %v1025
        %1072 = vmatpush.msra.mxu0 %v1023
        %1073 = vmatpush.msra.mxu0 %v1021
        %1074 = vmatpush.msra.mxu0 %v1019
        %1075 = vmatpush.msra.mxu0 %v1017
        %1076 = vmatpush.msra.mxu0 %v1015
        %1077 = vmatpush.msra.mxu0 %v1013
        %1078 = vmatpush.msra.mxu0 %v1011
        %1079 = vmatpush.msra.mxu0 %v1009
        %1080 = vmatpush.msra.mxu0 %v1007
        %1081 = vmatpush.msra.mxu0 %v1005
        %1082 = vmatmul.f32.gmra.mxu0 %v1049
        %v1083 = vpop.f32.mrf.mxu0
        %v1084 = vadd.f32 0.0, %v1083
        %1085 = vmatmul.f32.gmra.mxu0 %v1054
        %v1086 = vpop.f32.mrf.mxu0
        %v1087 = vadd.f32 0.0, %v1086
        %1088 = vmatmul.f32.gmra.mxu0 %v1053
        %v1089 = vpop.f32.mrf.mxu0
        %v1090 = vadd.f32 0.0, %v1089
        %1091 = vdwg.mxu0
        %1092 = vmatpush.msra.mxu0 0.0
        %1093 = vmatpush.msra.mxu0 0.0
        %1094 = vmatpush.msra.mxu0 0.0
        %1095 = vmatpush.msra.mxu0 0.0
        %1096 = vmatpush.msra.mxu0 0.0
        %1097 = vmatpush.msra.mxu0 0.0
        %1098 = vmatpush.msra.mxu0 0.0
        %1099 = vmatpush.msra.mxu0 0.0
        %1100 = vmatpush.msra.mxu0 0.0
        %1101 = vmatpush.msra.mxu0 0.0
        %1102 = vmatpush.msra.mxu0 0.0
        %1103 = vmatpush.msra.mxu0 0.0
        %1104 = vmatpush.msra.mxu0 0.0
        %1105 = vmatpush.msra.mxu0 0.0
        %1106 = vmatpush.msra.mxu0 %v1039
        %1107 = vmatpush.msra.mxu0 %v1037
        %1108 = vmatmul.f32.gmra.mxu0 %v1060
        %v1109 = vpop.f32.mrf.mxu0
        %v1110 = vadd.f32 %v1084, %v1109
        %1111 = vmatmul.f32.gmra.mxu0 %v1062
        %v1112 = vpop.f32.mrf.mxu0
        %v1113 = vadd.f32 %v1087, %v1112
        %1114 = vmatmul.f32.gmra.mxu0 %v1064
        %v1115 = vpop.f32.mrf.mxu0
        %v1116 = vadd.f32 %v1090, %v1115
        %1117 = vdwg.mxu0
        %1118 = vmatpush.msra.mxu0 %v1036
        %1119 = vmatpush.msra.mxu0 %v1034
        %1120 = vmatpush.msra.mxu0 %v1032
        %1121 = vmatpush.msra.mxu0 %v1030
        %1122 = vmatpush.msra.mxu0 %v1028
        %1123 = vmatpush.msra.mxu0 %v1026
        %1124 = vmatpush.msra.mxu0 %v1024
        %1125 = vmatpush.msra.mxu0 %v1022
        %1126 = vmatpush.msra.mxu0 %v1020
        %1127 = vmatpush.msra.mxu0 %v1018
        %1128 = vmatpush.msra.mxu0 %v1016
        %1129 = vmatpush.msra.mxu0 %v1014
        %1130 = vmatpush.msra.mxu0 %v1012
        %1131 = vmatpush.msra.mxu0 %v1010
        %1132 = vmatpush.msra.mxu0 %v1008
        %1133 = vmatpush.msra.mxu0 %v1006
        %1134 = vmatmul.f32.gmra.mxu0 %v1049
        %v1135 = vpop.f32.mrf.mxu0
        %v1136 = vadd.f32 0.0, %v1135
        %1137 = vmatmul.f32.gmra.mxu0 %v1054
        %v1138 = vpop.f32.mrf.mxu0
        %v1139 = vadd.f32 0.0, %v1138
        %1140 = vmatmul.f32.gmra.mxu0 %v1053
        %v1141 = vpop.f32.mrf.mxu0
        %v1142 = vadd.f32 0.0, %v1141
        %1143 = vdwg.mxu0
        %1144 = vmatpush.msra.mxu0 0.0
        %1145 = vmatpush.msra.mxu0 0.0
        %1146 = vmatpush.msra.mxu0 0.0
        %1147 = vmatpush.msra.mxu0 0.0
        %1148 = vmatpush.msra.mxu0 0.0
        %1149 = vmatpush.msra.mxu0 0.0
        %1150 = vmatpush.msra.mxu0 0.0
        %1151 = vmatpush.msra.mxu0 0.0
        %1152 = vmatpush.msra.mxu0 0.0
        %1153 = vmatpush.msra.mxu0 0.0
        %1154 = vmatpush.msra.mxu0 0.0
        %1155 = vmatpush.msra.mxu0 0.0
        %1156 = vmatpush.msra.mxu0 0.0
        %1157 = vmatpush.msra.mxu0 0.0
        %1158 = vmatpush.msra.mxu0 %v1040
        %1159 = vmatpush.msra.mxu0 %v1038
        %1160 = vmatmul.f32.gmra.mxu0 %v1060
        %v1161 = vpop.f32.mrf.mxu0
        %v1162 = vadd.f32 %v1136, %v1161
        %1163 = vmatmul.f32.gmra.mxu0 %v1062
        %v1164 = vpop.f32.mrf.mxu0
        %v1165 = vadd.f32 %v1139, %v1164
        %1166 = vmatmul.f32.gmra.mxu0 %v1064
        %v1167 = vpop.f32.mrf.mxu0
        %v1168 = vadd.f32 %v1142, %v1167
        %1169 = vdwg.mxu0
        %v1170 = vsel %vm549, %v962, 0
        %v1172 = vsel %vm549, %v964, 0
        %v1174 = vsel %vm549, %v966, 0
        %1176 = vmatpush.msra.mxu0 %v998
        %1177 = vmatpush.msra.mxu0 %v996
        %1178 = vmatpush.msra.mxu0 %v994
        %1179 = vmatpush.msra.mxu0 %v992
        %1180 = vmatpush.msra.mxu0 %v990
        %1181 = vmatpush.msra.mxu0 %v988
        %1182 = vmatpush.msra.mxu0 %v986
        %1183 = vmatpush.msra.mxu0 %v984
        %1184 = vmatpush.msra.mxu0 %v982
        %1185 = vmatpush.msra.mxu0 %v980
        %1186 = vmatpush.msra.mxu0 %v978
        %1187 = vmatpush.msra.mxu0 %v976
        %1188 = vmatpush.msra.mxu0 %v974
        %1189 = vmatpush.msra.mxu0 %v972
        %1190 = vmatpush.msra.mxu0 %v970
        %1191 = vmatpush.msra.mxu0 %v968
        %1192 = vmatmul.f32.gmra.mxu0 %v961
        %v1193 = vpop.f32.mrf.mxu0
        %v1194 = vadd.f32 %v1110, %v1193
        %1195 = vmatmul.f32.gmra.mxu0 %v963
        %v1196 = vpop.f32.mrf.mxu0
        %v1197 = vadd.f32 %v1113, %v1196
        %1198 = vmatmul.f32.gmra.mxu0 %v965
        %v1199 = vpop.f32.mrf.mxu0
        %v1200 = vadd.f32 %v1116, %v1199
        %1201 = vdwg.mxu0
        %1202 = vmatpush.msra.mxu0 0.0
        %1203 = vmatpush.msra.mxu0 0.0
        %1204 = vmatpush.msra.mxu0 0.0
        %1205 = vmatpush.msra.mxu0 0.0
        %1206 = vmatpush.msra.mxu0 0.0
        %1207 = vmatpush.msra.mxu0 0.0
        %1208 = vmatpush.msra.mxu0 0.0
        %1209 = vmatpush.msra.mxu0 0.0
        %1210 = vmatpush.msra.mxu0 0.0
        %1211 = vmatpush.msra.mxu0 0.0
        %1212 = vmatpush.msra.mxu0 0.0
        %1213 = vmatpush.msra.mxu0 0.0
        %1214 = vmatpush.msra.mxu0 0.0
        %1215 = vmatpush.msra.mxu0 0.0
        %1216 = vmatpush.msra.mxu0 %v1002
        %1217 = vmatpush.msra.mxu0 %v1000
        %1218 = vmatmul.f32.gmra.mxu0 %v1170
        %v1219 = vpop.f32.mrf.mxu0
        %v1220 = vadd.f32 %v1194, %v1219
        %1221 = vmatmul.f32.gmra.mxu0 %v1172
        %v1222 = vpop.f32.mrf.mxu0
        %v1223 = vadd.f32 %v1197, %v1222
        %1224 = vmatmul.f32.gmra.mxu0 %v1174
        %v1225 = vpop.f32.mrf.mxu0
        %v1226 = vadd.f32 %v1200, %v1225
        %1227 = vdwg.mxu0
        %1228 = vmatpush.msra.mxu0 %v999
        %1229 = vmatpush.msra.mxu0 %v997
        %1230 = vmatpush.msra.mxu0 %v995
        %1231 = vmatpush.msra.mxu0 %v993
        %1232 = vmatpush.msra.mxu0 %v991
        %1233 = vmatpush.msra.mxu0 %v989
        %1234 = vmatpush.msra.mxu0 %v987
        %1235 = vmatpush.msra.mxu0 %v985
        %1236 = vmatpush.msra.mxu0 %v983
        %1237 = vmatpush.msra.mxu0 %v981
        %1238 = vmatpush.msra.mxu0 %v979
        %1239 = vmatpush.msra.mxu0 %v977
        %1240 = vmatpush.msra.mxu0 %v975
        %1241 = vmatpush.msra.mxu0 %v973
        %1242 = vmatpush.msra.mxu0 %v971
        %1243 = vmatpush.msra.mxu0 %v969
        %1244 = vmatmul.f32.gmra.mxu0 %v961
        %v1245 = vpop.f32.mrf.mxu0
        %v1246 = vadd.f32 %v1162, %v1245
        %1247 = vmatmul.f32.gmra.mxu0 %v963
        %v1248 = vpop.f32.mrf.mxu0
        %v1249 = vadd.f32 %v1165, %v1248
        %1250 = vmatmul.f32.gmra.mxu0 %v965
        %v1251 = vpop.f32.mrf.mxu0
        %v1252 = vadd.f32 %v1168, %v1251
        %1253 = vdwg.mxu0
        %1254 = vmatpush.msra.mxu0 0.0
        %1255 = vmatpush.msra.mxu0 0.0
        %1256 = vmatpush.msra.mxu0 0.0
        %1257 = vmatpush.msra.mxu0 0.0
        %1258 = vmatpush.msra.mxu0 0.0
        %1259 = vmatpush.msra.mxu0 0.0
        %1260 = vmatpush.msra.mxu0 0.0
        %1261 = vmatpush.msra.mxu0 0.0
        %1262 = vmatpush.msra.mxu0 0.0
        %1263 = vmatpush.msra.mxu0 0.0
        %1264 = vmatpush.msra.mxu0 0.0
        %1265 = vmatpush.msra.mxu0 0.0
        %1266 = vmatpush.msra.mxu0 0.0
        %1267 = vmatpush.msra.mxu0 0.0
        %1268 = vmatpush.msra.mxu0 %v1003
        %1269 = vmatpush.msra.mxu0 %v1001
        %1270 = vmatmul.f32.gmra.mxu0 %v1170
        %v1271 = vpop.f32.mrf.mxu0
        %v1272 = vadd.f32 %v1246, %v1271
        %1273 = vmatmul.f32.gmra.mxu0 %v1172
        %v1274 = vpop.f32.mrf.mxu0
        %v1275 = vadd.f32 %v1249, %v1274
        %1276 = vmatmul.f32.gmra.mxu0 %v1174
        %v1277 = vpop.f32.mrf.mxu0
        %v1278 = vadd.f32 %v1252, %v1277
        %1279 = vdwg.mxu0
        %s1280 = scalar_lea.vmem [#allocation2], 1440
        %v1281 = vld [vmem:[%s1280] sm:$0xff]
        %v1282 = vld [vmem:[%s1280 + $0x8] sm:$0xff]
        %v1283 = vld [vmem:[%s1280 + $0x10] sm:$0xff]
        %v1284 = vld [vmem:[%s1280 + $0x18] sm:$0xff]
        %v1285 = vld [vmem:[%s1280 + $0x20] sm:$0xff]
        %v1286 = vld [vmem:[%s1280 + $0x28] sm:$0xff]
        %v1287 = vld [vmem:[%s1280 + $0x30] sm:$0xff]
        %v1288 = vld [vmem:[%s1280 + $0x38] sm:$0xff]
        %v1289 = vld [vmem:[%s1280 + $0x40] sm:$0xff]
        %v1290 = vld [vmem:[%s1280 + $0x48] sm:$0xff]
        %v1291 = vld [vmem:[%s1280 + $0x50] sm:$0xff]
        %v1292 = vld [vmem:[%s1280 + $0x58] sm:$0xff]
        %v1293 = vld [vmem:[%s1280 + $0x60] sm:$0xff]
        %v1294 = vld [vmem:[%s1280 + $0x68] sm:$0xff]
        %v1295 = vld [vmem:[%s1280 + $0x70] sm:$0xff]
        %v1296 = vld [vmem:[%s1280 + $0x78] sm:$0xff]
        %v1297 = vld [vmem:[%s1280 + $0x80] sm:$0xff]
        %v1298 = vld [vmem:[%s1280 + $0x88] sm:$0xff]
        %v1299 = vld [vmem:[%s1280 + $0x90] sm:$0xff]
        %v1300 = vld [vmem:[%s1280 + $0x98] sm:$0xff]
        %v1301 = vld [vmem:[%s1280 + $0xa0] sm:$0xff]
        %v1302 = vld [vmem:[%s1280 + $0xa8] sm:$0xff]
        %v1303 = vld [vmem:[%s1280 + $0xb0] sm:$0xff]
        %v1304 = vld [vmem:[%s1280 + $0xb8] sm:$0xff]
        %v1305 = vld [vmem:[%s1280 + $0xc0] sm:$0xff]
        %v1306 = vld [vmem:[%s1280 + $0xc8] sm:$0xff]
        %v1307 = vld [vmem:[%s1280 + $0xd0] sm:$0xff]
        %v1308 = vld [vmem:[%s1280 + $0xd8] sm:$0xff]
        %v1309 = vld [vmem:[%s1280 + $0xe0] sm:$0xff]
        %v1310 = vld [vmem:[%s1280 + $0xe8] sm:$0xff]
        %v1311 = vld [vmem:[%s1280 + $0xf0] sm:$0xff]
        %v1312 = vld [vmem:[%s1280 + $0xf8] sm:$0xff]
        %v1313 = vld [vmem:[%s1280 + $0x100] sm:$0xff]
        %v1314 = vld [vmem:[%s1280 + $0x108] sm:$0xff]
        %v1315 = vld [vmem:[%s1280 + $0x110] sm:$0xff]
        %v1316 = vld [vmem:[%s1280 + $0x118] sm:$0xff]
        %v1317 = vrot.slane %v961, 2
        %v1318 = vrot.slane %v963, 2
        %v1319 = vsel %vm807, %v1317, %v1318
        %v1320 = vrot.slane %v962, 2
        %v1321 = vrot.slane %v964, 2
        %v1322 = vsel %vm807, %v1320, %v1321
        %v1323 = vrot.slane %v965, 2
        %v1324 = vsel %vm807, %v1318, %v1323
        %v1325 = vrot.slane %v966, 2
        %v1326 = vsel %vm807, %v1321, %v1325
        %v1330 = vsel %vm549, %v1322, 0
        %v1332 = vsel %vm549, %v1326, 0
        %v1334 = vsel %vm549, %v1325, 0
        %1336 = vmatpush.msra.mxu0 %v1311
        %1337 = vmatpush.msra.mxu0 %v1309
        %1338 = vmatpush.msra.mxu0 %v1307
        %1339 = vmatpush.msra.mxu0 %v1305
        %1340 = vmatpush.msra.mxu0 %v1303
        %1341 = vmatpush.msra.mxu0 %v1301
        %1342 = vmatpush.msra.mxu0 %v1299
        %1343 = vmatpush.msra.mxu0 %v1297
        %1344 = vmatpush.msra.mxu0 %v1295
        %1345 = vmatpush.msra.mxu0 %v1293
        %1346 = vmatpush.msra.mxu0 %v1291
        %1347 = vmatpush.msra.mxu0 %v1289
        %1348 = vmatpush.msra.mxu0 %v1287
        %1349 = vmatpush.msra.mxu0 %v1285
        %1350 = vmatpush.msra.mxu0 %v1283
        %1351 = vmatpush.msra.mxu0 %v1281
        %1352 = vmatmul.f32.gmra.mxu0 %v1319
        %v1353 = vpop.f32.mrf.mxu0
        %v1354 = vadd.f32 0.0, %v1353
        %1355 = vmatmul.f32.gmra.mxu0 %v1324
        %v1356 = vpop.f32.mrf.mxu0
        %v1357 = vadd.f32 0.0, %v1356
        %1358 = vmatmul.f32.gmra.mxu0 %v1323
        %v1359 = vpop.f32.mrf.mxu0
        %v1360 = vadd.f32 0.0, %v1359
        %1361 = vdwg.mxu0
        %1362 = vmatpush.msra.mxu0 0.0
        %1363 = vmatpush.msra.mxu0 0.0
        %1364 = vmatpush.msra.mxu0 0.0
        %1365 = vmatpush.msra.mxu0 0.0
        %1366 = vmatpush.msra.mxu0 0.0
        %1367 = vmatpush.msra.mxu0 0.0
        %1368 = vmatpush.msra.mxu0 0.0
        %1369 = vmatpush.msra.mxu0 0.0
        %1370 = vmatpush.msra.mxu0 0.0
        %1371 = vmatpush.msra.mxu0 0.0
        %1372 = vmatpush.msra.mxu0 0.0
        %1373 = vmatpush.msra.mxu0 0.0
        %1374 = vmatpush.msra.mxu0 0.0
        %1375 = vmatpush.msra.mxu0 0.0
        %1376 = vmatpush.msra.mxu0 %v1315
        %1377 = vmatpush.msra.mxu0 %v1313
        %1378 = vmatmul.f32.gmra.mxu0 %v1330
        %v1379 = vpop.f32.mrf.mxu0
        %v1380 = vadd.f32 %v1354, %v1379
        %1381 = vmatmul.f32.gmra.mxu0 %v1332
        %v1382 = vpop.f32.mrf.mxu0
        %v1383 = vadd.f32 %v1357, %v1382
        %1384 = vmatmul.f32.gmra.mxu0 %v1334
        %v1385 = vpop.f32.mrf.mxu0
        %v1386 = vadd.f32 %v1360, %v1385
        %1387 = vdwg.mxu0
        %1388 = vmatpush.msra.mxu0 %v1312
        %1389 = vmatpush.msra.mxu0 %v1310
        %1390 = vmatpush.msra.mxu0 %v1308
        %1391 = vmatpush.msra.mxu0 %v1306
        %1392 = vmatpush.msra.mxu0 %v1304
        %1393 = vmatpush.msra.mxu0 %v1302
        %1394 = vmatpush.msra.mxu0 %v1300
        %1395 = vmatpush.msra.mxu0 %v1298
        %1396 = vmatpush.msra.mxu0 %v1296
        %1397 = vmatpush.msra.mxu0 %v1294
        %1398 = vmatpush.msra.mxu0 %v1292
        %1399 = vmatpush.msra.mxu0 %v1290
        %1400 = vmatpush.msra.mxu0 %v1288
        %1401 = vmatpush.msra.mxu0 %v1286
        %1402 = vmatpush.msra.mxu0 %v1284
        %1403 = vmatpush.msra.mxu0 %v1282
        %1404 = vmatmul.f32.gmra.mxu0 %v1319
        %v1405 = vpop.f32.mrf.mxu0
        %v1406 = vadd.f32 0.0, %v1405
        %1407 = vmatmul.f32.gmra.mxu0 %v1324
        %v1408 = vpop.f32.mrf.mxu0
        %v1409 = vadd.f32 0.0, %v1408
        %1410 = vmatmul.f32.gmra.mxu0 %v1323
        %v1411 = vpop.f32.mrf.mxu0
        %v1412 = vadd.f32 0.0, %v1411
        %1413 = vdwg.mxu0
        %1414 = vmatpush.msra.mxu0 0.0
        %1415 = vmatpush.msra.mxu0 0.0
        %1416 = vmatpush.msra.mxu0 0.0
        %1417 = vmatpush.msra.mxu0 0.0
        %1418 = vmatpush.msra.mxu0 0.0
        %1419 = vmatpush.msra.mxu0 0.0
        %1420 = vmatpush.msra.mxu0 0.0
        %1421 = vmatpush.msra.mxu0 0.0
        %1422 = vmatpush.msra.mxu0 0.0
        %1423 = vmatpush.msra.mxu0 0.0
        %1424 = vmatpush.msra.mxu0 0.0
        %1425 = vmatpush.msra.mxu0 0.0
        %1426 = vmatpush.msra.mxu0 0.0
        %1427 = vmatpush.msra.mxu0 0.0
        %1428 = vmatpush.msra.mxu0 %v1316
        %1429 = vmatpush.msra.mxu0 %v1314
        %1430 = vmatmul.f32.gmra.mxu0 %v1330
        %v1431 = vpop.f32.mrf.mxu0
        %v1432 = vadd.f32 %v1406, %v1431
        %1433 = vmatmul.f32.gmra.mxu0 %v1332
        %v1434 = vpop.f32.mrf.mxu0
        %v1435 = vadd.f32 %v1409, %v1434
        %1436 = vmatmul.f32.gmra.mxu0 %v1334
        %v1437 = vpop.f32.mrf.mxu0
        %v1438 = vadd.f32 %v1412, %v1437
        %1439 = vdwg.mxu0
        %v1440 = vadd.f32 %v1220, %v1380
        %v1441 = vadd.f32 %v1272, %v1432
        %v1442 = vadd.f32 %v1223, %v1383
        %v1443 = vadd.f32 %v1275, %v1435
        %v1444 = vadd.f32 %v1226, %v1386
        %v1445 = vadd.f32 %v1278, %v1438
        %v1446 = vld [vmem:[#allocation8] sm:$0xff]
        %v1447 = vld [vmem:[#allocation8 + $0x8] sm:$0xff]
        %v1448 = vld [vmem:[#allocation8 + $0x10] sm:$0xff]
        %v1449 = vld [vmem:[#allocation8 + $0x18] sm:$0xff]
        %v1450 = vld [vmem:[#allocation8 + $0x20] sm:$0x3]
        %v1451 = vld [vmem:[#allocation8 + $0x28] sm:$0x3]
        %v1452 = vmul.f32 %v1440, %v1446
        %v1453 = vmul.f32 %v1441, %v1447
        %v1454 = vmul.f32 %v1442, %v1448
        %v1455 = vmul.f32 %v1443, %v1449
        %v1456 = vmul.f32 %v1444, %v1450
        %v1457 = vmul.f32 %v1445, %v1451
        %v1458 = vld [vmem:[#allocation13] sm:$0xff]
        %v1459 = vld [vmem:[#allocation13 + $0x8] sm:$0xff]
        %v1460 = vld [vmem:[#allocation13 + $0x10] sm:$0xff]
        %v1461 = vld [vmem:[#allocation13 + $0x18] sm:$0xff]
        %v1462 = vld [vmem:[#allocation13 + $0x20] sm:$0x3]
        %v1463 = vld [vmem:[#allocation13 + $0x28] sm:$0x3]
        %v1464 = vadd.f32 %v1452, %v1458
        %v1465 = vadd.f32 %v1453, %v1459
        %v1466 = vadd.f32 %v1454, %v1460
        %v1467 = vadd.f32 %v1455, %v1461
        %v1468 = vadd.f32 %v1456, %v1462
        %v1469 = vadd.f32 %v1457, %v1463
        %v1470 = vmax.f32 %v1464, 0.0
        %v1471 = vmax.f32 %v1465, 0.0
        %v1472 = vmax.f32 %v1466, 0.0
        %v1473 = vmax.f32 %v1467, 0.0
        %v1474 = vmax.f32 %v1468, 0.0
        %v1475 = vmax.f32 %v1469, 0.0
        %s1476 = scalar_lea.vmem [#allocation2], 1728
        %v1477 = vld [vmem:[%s1476] sm:$0xff]
        %v1478 = vld [vmem:[%s1476 + $0x8] sm:$0xff]
        %v1479 = vld [vmem:[%s1476 + $0x10] sm:$0xff]
        %v1480 = vld [vmem:[%s1476 + $0x18] sm:$0xff]
        %v1481 = vld [vmem:[%s1476 + $0x20] sm:$0xff]
        %v1482 = vld [vmem:[%s1476 + $0x28] sm:$0xff]
        %v1483 = vld [vmem:[%s1476 + $0x30] sm:$0xff]
        %v1484 = vld [vmem:[%s1476 + $0x38] sm:$0xff]
        %v1485 = vld [vmem:[%s1476 + $0x40] sm:$0xff]
        %v1486 = vld [vmem:[%s1476 + $0x48] sm:$0xff]
        %v1487 = vld [vmem:[%s1476 + $0x50] sm:$0xff]
        %v1488 = vld [vmem:[%s1476 + $0x58] sm:$0xff]
        %v1489 = vld [vmem:[%s1476 + $0x60] sm:$0xff]
        %v1490 = vld [vmem:[%s1476 + $0x68] sm:$0xff]
        %v1491 = vld [vmem:[%s1476 + $0x70] sm:$0xff]
        %v1492 = vld [vmem:[%s1476 + $0x78] sm:$0xff]
        %v1493 = vld [vmem:[%s1476 + $0x80] sm:$0xff]
        %v1494 = vld [vmem:[%s1476 + $0x88] sm:$0xff]
        %v1495 = vld [vmem:[%s1476 + $0x90] sm:$0xff]
        %v1496 = vld [vmem:[%s1476 + $0x98] sm:$0xff]
        %v1497 = vld [vmem:[%s1476 + $0xa0] sm:$0xff]
        %v1498 = vld [vmem:[%s1476 + $0xa8] sm:$0xff]
        %v1499 = vld [vmem:[%s1476 + $0xb0] sm:$0xff]
        %v1500 = vld [vmem:[%s1476 + $0xb8] sm:$0xff]
        %v1501 = vld [vmem:[%s1476 + $0xc0] sm:$0xff]
        %v1502 = vld [vmem:[%s1476 + $0xc8] sm:$0xff]
        %v1503 = vld [vmem:[%s1476 + $0xd0] sm:$0xff]
        %v1504 = vld [vmem:[%s1476 + $0xd8] sm:$0xff]
        %v1505 = vld [vmem:[%s1476 + $0xe0] sm:$0xff]
        %v1506 = vld [vmem:[%s1476 + $0xe8] sm:$0xff]
        %v1507 = vld [vmem:[%s1476 + $0xf0] sm:$0xff]
        %v1508 = vld [vmem:[%s1476 + $0xf8] sm:$0xff]
        %v1509 = vld [vmem:[%s1476 + $0x100] sm:$0xff]
        %v1510 = vld [vmem:[%s1476 + $0x108] sm:$0xff]
        %v1511 = vld [vmem:[%s1476 + $0x110] sm:$0xff]
        %v1512 = vld [vmem:[%s1476 + $0x118] sm:$0xff]
        %s1513 = scalar_lea.vmem [#allocation2], 2016
        %v1514 = vld [vmem:[%s1513] sm:$0xff]
        %v1515 = vld [vmem:[%s1513 + $0x8] sm:$0xff]
        %v1516 = vld [vmem:[%s1513 + $0x10] sm:$0xff]
        %v1517 = vld [vmem:[%s1513 + $0x18] sm:$0xff]
        %v1518 = vld [vmem:[%s1513 + $0x20] sm:$0xff]
        %v1519 = vld [vmem:[%s1513 + $0x28] sm:$0xff]
        %v1520 = vld [vmem:[%s1513 + $0x30] sm:$0xff]
        %v1521 = vld [vmem:[%s1513 + $0x38] sm:$0xff]
        %v1522 = vld [vmem:[%s1513 + $0x40] sm:$0xff]
        %v1523 = vld [vmem:[%s1513 + $0x48] sm:$0xff]
        %v1524 = vld [vmem:[%s1513 + $0x50] sm:$0xff]
        %v1525 = vld [vmem:[%s1513 + $0x58] sm:$0xff]
        %v1526 = vld [vmem:[%s1513 + $0x60] sm:$0xff]
        %v1527 = vld [vmem:[%s1513 + $0x68] sm:$0xff]
        %v1528 = vld [vmem:[%s1513 + $0x70] sm:$0xff]
        %v1529 = vld [vmem:[%s1513 + $0x78] sm:$0xff]
        %v1530 = vld [vmem:[%s1513 + $0x80] sm:$0xff]
        %v1531 = vld [vmem:[%s1513 + $0x88] sm:$0xff]
        %v1532 = vld [vmem:[%s1513 + $0x90] sm:$0xff]
        %v1533 = vld [vmem:[%s1513 + $0x98] sm:$0xff]
        %v1534 = vld [vmem:[%s1513 + $0xa0] sm:$0xff]
        %v1535 = vld [vmem:[%s1513 + $0xa8] sm:$0xff]
        %v1536 = vld [vmem:[%s1513 + $0xb0] sm:$0xff]
        %v1537 = vld [vmem:[%s1513 + $0xb8] sm:$0xff]
        %v1538 = vld [vmem:[%s1513 + $0xc0] sm:$0xff]
        %v1539 = vld [vmem:[%s1513 + $0xc8] sm:$0xff]
        %v1540 = vld [vmem:[%s1513 + $0xd0] sm:$0xff]
        %v1541 = vld [vmem:[%s1513 + $0xd8] sm:$0xff]
        %v1542 = vld [vmem:[%s1513 + $0xe0] sm:$0xff]
        %v1543 = vld [vmem:[%s1513 + $0xe8] sm:$0xff]
        %v1544 = vld [vmem:[%s1513 + $0xf0] sm:$0xff]
        %v1545 = vld [vmem:[%s1513 + $0xf8] sm:$0xff]
        %v1546 = vld [vmem:[%s1513 + $0x100] sm:$0xff]
        %v1547 = vld [vmem:[%s1513 + $0x108] sm:$0xff]
        %v1548 = vld [vmem:[%s1513 + $0x110] sm:$0xff]
        %v1549 = vld [vmem:[%s1513 + $0x118] sm:$0xff]
        %v1556 = vrot.slane %v1470, 1
        %v1557 = vrot.slane %v1472, 1
        %v1558 = vsel %vm535, %v1556, %v1557
        %v1559 = vrot.slane %v1471, 1
        %v1560 = vrot.slane %v1473, 1
        %v1561 = vsel %vm535, %v1559, %v1560
        %v1562 = vrot.slane %v1474, 1
        %v1563 = vsel %vm535, %v1557, %v1562
        %v1564 = vrot.slane %v1475, 1
        %v1565 = vsel %vm535, %v1560, %v1564
        %v1568 = vsel %vm549, %v1561, 0
        %v1570 = vsel %vm549, %v1565, 0
        %1572 = vmatpush.msra.mxu0 %v1544
        %1573 = vmatpush.msra.mxu0 %v1542
        %1574 = vmatpush.msra.mxu0 %v1540
        %1575 = vmatpush.msra.mxu0 %v1538
        %1576 = vmatpush.msra.mxu0 %v1536
        %1577 = vmatpush.msra.mxu0 %v1534
        %1578 = vmatpush.msra.mxu0 %v1532
        %1579 = vmatpush.msra.mxu0 %v1530
        %1580 = vmatpush.msra.mxu0 %v1528
        %1581 = vmatpush.msra.mxu0 %v1526
        %1582 = vmatpush.msra.mxu0 %v1524
        %1583 = vmatpush.msra.mxu0 %v1522
        %1584 = vmatpush.msra.mxu0 %v1520
        %1585 = vmatpush.msra.mxu0 %v1518
        %1586 = vmatpush.msra.mxu0 %v1516
        %1587 = vmatpush.msra.mxu0 %v1514
        %1588 = vmatmul.f32.gmra.mxu0 %v1558
        %v1589 = vpop.f32.mrf.mxu0
        %v1590 = vadd.f32 0.0, %v1589
        %1591 = vmatmul.f32.gmra.mxu0 %v1563
        %v1592 = vpop.f32.mrf.mxu0
        %v1593 = vadd.f32 0.0, %v1592
        %1594 = vdwg.mxu0
        %1595 = vmatpush.msra.mxu0 0.0
        %1596 = vmatpush.msra.mxu0 0.0
        %1597 = vmatpush.msra.mxu0 0.0
        %1598 = vmatpush.msra.mxu0 0.0
        %1599 = vmatpush.msra.mxu0 0.0
        %1600 = vmatpush.msra.mxu0 0.0
        %1601 = vmatpush.msra.mxu0 0.0
        %1602 = vmatpush.msra.mxu0 0.0
        %1603 = vmatpush.msra.mxu0 0.0
        %1604 = vmatpush.msra.mxu0 0.0
        %1605 = vmatpush.msra.mxu0 0.0
        %1606 = vmatpush.msra.mxu0 0.0
        %1607 = vmatpush.msra.mxu0 0.0
        %1608 = vmatpush.msra.mxu0 0.0
        %1609 = vmatpush.msra.mxu0 %v1548
        %1610 = vmatpush.msra.mxu0 %v1546
        %1611 = vmatmul.f32.gmra.mxu0 %v1568
        %v1612 = vpop.f32.mrf.mxu0
        %v1613 = vadd.f32 %v1590, %v1612
        %1614 = vmatmul.f32.gmra.mxu0 %v1570
        %v1615 = vpop.f32.mrf.mxu0
        %v1616 = vadd.f32 %v1593, %v1615
        %1617 = vdwg.mxu0
        %1618 = vmatpush.msra.mxu0 %v1545
        %1619 = vmatpush.msra.mxu0 %v1543
        %1620 = vmatpush.msra.mxu0 %v1541
        %1621 = vmatpush.msra.mxu0 %v1539
        %1622 = vmatpush.msra.mxu0 %v1537
        %1623 = vmatpush.msra.mxu0 %v1535
        %1624 = vmatpush.msra.mxu0 %v1533
        %1625 = vmatpush.msra.mxu0 %v1531
        %1626 = vmatpush.msra.mxu0 %v1529
        %1627 = vmatpush.msra.mxu0 %v1527
        %1628 = vmatpush.msra.mxu0 %v1525
        %1629 = vmatpush.msra.mxu0 %v1523
        %1630 = vmatpush.msra.mxu0 %v1521
        %1631 = vmatpush.msra.mxu0 %v1519
        %1632 = vmatpush.msra.mxu0 %v1517
        %1633 = vmatpush.msra.mxu0 %v1515
        %1634 = vmatmul.f32.gmra.mxu0 %v1558
        %v1635 = vpop.f32.mrf.mxu0
        %v1636 = vadd.f32 0.0, %v1635
        %1637 = vmatmul.f32.gmra.mxu0 %v1563
        %v1638 = vpop.f32.mrf.mxu0
        %v1639 = vadd.f32 0.0, %v1638
        %1640 = vdwg.mxu0
        %1641 = vmatpush.msra.mxu0 0.0
        %1642 = vmatpush.msra.mxu0 0.0
        %1643 = vmatpush.msra.mxu0 0.0
        %1644 = vmatpush.msra.mxu0 0.0
        %1645 = vmatpush.msra.mxu0 0.0
        %1646 = vmatpush.msra.mxu0 0.0
        %1647 = vmatpush.msra.mxu0 0.0
        %1648 = vmatpush.msra.mxu0 0.0
        %1649 = vmatpush.msra.mxu0 0.0
        %1650 = vmatpush.msra.mxu0 0.0
        %1651 = vmatpush.msra.mxu0 0.0
        %1652 = vmatpush.msra.mxu0 0.0
        %1653 = vmatpush.msra.mxu0 0.0
        %1654 = vmatpush.msra.mxu0 0.0
        %1655 = vmatpush.msra.mxu0 %v1549
        %1656 = vmatpush.msra.mxu0 %v1547
        %1657 = vmatmul.f32.gmra.mxu0 %v1568
        %v1658 = vpop.f32.mrf.mxu0
        %v1659 = vadd.f32 %v1636, %v1658
        %1660 = vmatmul.f32.gmra.mxu0 %v1570
        %v1661 = vpop.f32.mrf.mxu0
        %v1662 = vadd.f32 %v1639, %v1661
        %1663 = vdwg.mxu0
        %v1664 = vsel %vm549, %v1471, 0
        %v1666 = vsel %vm549, %v1473, 0
        %1668 = vmatpush.msra.mxu0 %v1507
        %1669 = vmatpush.msra.mxu0 %v1505
        %1670 = vmatpush.msra.mxu0 %v1503
        %1671 = vmatpush.msra.mxu0 %v1501
        %1672 = vmatpush.msra.mxu0 %v1499
        %1673 = vmatpush.msra.mxu0 %v1497
        %1674 = vmatpush.msra.mxu0 %v1495
        %1675 = vmatpush.msra.mxu0 %v1493
        %1676 = vmatpush.msra.mxu0 %v1491
        %1677 = vmatpush.msra.mxu0 %v1489
        %1678 = vmatpush.msra.mxu0 %v1487
        %1679 = vmatpush.msra.mxu0 %v1485
        %1680 = vmatpush.msra.mxu0 %v1483
        %1681 = vmatpush.msra.mxu0 %v1481
        %1682 = vmatpush.msra.mxu0 %v1479
        %1683 = vmatpush.msra.mxu0 %v1477
        %1684 = vmatmul.f32.gmra.mxu0 %v1470
        %v1685 = vpop.f32.mrf.mxu0
        %v1686 = vadd.f32 %v1613, %v1685
        %1687 = vmatmul.f32.gmra.mxu0 %v1472
        %v1688 = vpop.f32.mrf.mxu0
        %v1689 = vadd.f32 %v1616, %v1688
        %1690 = vdwg.mxu0
        %1691 = vmatpush.msra.mxu0 0.0
        %1692 = vmatpush.msra.mxu0 0.0
        %1693 = vmatpush.msra.mxu0 0.0
        %1694 = vmatpush.msra.mxu0 0.0
        %1695 = vmatpush.msra.mxu0 0.0
        %1696 = vmatpush.msra.mxu0 0.0
        %1697 = vmatpush.msra.mxu0 0.0
        %1698 = vmatpush.msra.mxu0 0.0
        %1699 = vmatpush.msra.mxu0 0.0
        %1700 = vmatpush.msra.mxu0 0.0
        %1701 = vmatpush.msra.mxu0 0.0
        %1702 = vmatpush.msra.mxu0 0.0
        %1703 = vmatpush.msra.mxu0 0.0
        %1704 = vmatpush.msra.mxu0 0.0
        %1705 = vmatpush.msra.mxu0 %v1511
        %1706 = vmatpush.msra.mxu0 %v1509
        %1707 = vmatmul.f32.gmra.mxu0 %v1664
        %v1708 = vpop.f32.mrf.mxu0
        %v1709 = vadd.f32 %v1686, %v1708
        %1710 = vmatmul.f32.gmra.mxu0 %v1666
        %v1711 = vpop.f32.mrf.mxu0
        %v1712 = vadd.f32 %v1689, %v1711
        %1713 = vdwg.mxu0
        %1714 = vmatpush.msra.mxu0 %v1508
        %1715 = vmatpush.msra.mxu0 %v1506
        %1716 = vmatpush.msra.mxu0 %v1504
        %1717 = vmatpush.msra.mxu0 %v1502
        %1718 = vmatpush.msra.mxu0 %v1500
        %1719 = vmatpush.msra.mxu0 %v1498
        %1720 = vmatpush.msra.mxu0 %v1496
        %1721 = vmatpush.msra.mxu0 %v1494
        %1722 = vmatpush.msra.mxu0 %v1492
        %1723 = vmatpush.msra.mxu0 %v1490
        %1724 = vmatpush.msra.mxu0 %v1488
        %1725 = vmatpush.msra.mxu0 %v1486
        %1726 = vmatpush.msra.mxu0 %v1484
        %1727 = vmatpush.msra.mxu0 %v1482
        %1728 = vmatpush.msra.mxu0 %v1480
        %1729 = vmatpush.msra.mxu0 %v1478
        %1730 = vmatmul.f32.gmra.mxu0 %v1470
        %v1731 = vpop.f32.mrf.mxu0
        %v1732 = vadd.f32 %v1659, %v1731
        %1733 = vmatmul.f32.gmra.mxu0 %v1472
        %v1734 = vpop.f32.mrf.mxu0
        %v1735 = vadd.f32 %v1662, %v1734
        %1736 = vdwg.mxu0
        %1737 = vmatpush.msra.mxu0 0.0
        %1738 = vmatpush.msra.mxu0 0.0
        %1739 = vmatpush.msra.mxu0 0.0
        %1740 = vmatpush.msra.mxu0 0.0
        %1741 = vmatpush.msra.mxu0 0.0
        %1742 = vmatpush.msra.mxu0 0.0
        %1743 = vmatpush.msra.mxu0 0.0
        %1744 = vmatpush.msra.mxu0 0.0
        %1745 = vmatpush.msra.mxu0 0.0
        %1746 = vmatpush.msra.mxu0 0.0
        %1747 = vmatpush.msra.mxu0 0.0
        %1748 = vmatpush.msra.mxu0 0.0
        %1749 = vmatpush.msra.mxu0 0.0
        %1750 = vmatpush.msra.mxu0 0.0
        %1751 = vmatpush.msra.mxu0 %v1512
        %1752 = vmatpush.msra.mxu0 %v1510
        %1753 = vmatmul.f32.gmra.mxu0 %v1664
        %v1754 = vpop.f32.mrf.mxu0
        %v1755 = vadd.f32 %v1732, %v1754
        %1756 = vmatmul.f32.gmra.mxu0 %v1666
        %v1757 = vpop.f32.mrf.mxu0
        %v1758 = vadd.f32 %v1735, %v1757
        %1759 = vdwg.mxu0
        %s1760 = scalar_lea.vmem [#allocation2], 2304
        %v1761 = vld [vmem:[%s1760] sm:$0xff]
        %v1762 = vld [vmem:[%s1760 + $0x8] sm:$0xff]
        %v1763 = vld [vmem:[%s1760 + $0x10] sm:$0xff]
        %v1764 = vld [vmem:[%s1760 + $0x18] sm:$0xff]
        %v1765 = vld [vmem:[%s1760 + $0x20] sm:$0xff]
        %v1766 = vld [vmem:[%s1760 + $0x28] sm:$0xff]
        %v1767 = vld [vmem:[%s1760 + $0x30] sm:$0xff]
        %v1768 = vld [vmem:[%s1760 + $0x38] sm:$0xff]
        %v1769 = vld [vmem:[%s1760 + $0x40] sm:$0xff]
        %v1770 = vld [vmem:[%s1760 + $0x48] sm:$0xff]
        %v1771 = vld [vmem:[%s1760 + $0x50] sm:$0xff]
        %v1772 = vld [vmem:[%s1760 + $0x58] sm:$0xff]
        %v1773 = vld [vmem:[%s1760 + $0x60] sm:$0xff]
        %v1774 = vld [vmem:[%s1760 + $0x68] sm:$0xff]
        %v1775 = vld [vmem:[%s1760 + $0x70] sm:$0xff]
        %v1776 = vld [vmem:[%s1760 + $0x78] sm:$0xff]
        %v1777 = vld [vmem:[%s1760 + $0x80] sm:$0xff]
        %v1778 = vld [vmem:[%s1760 + $0x88] sm:$0xff]
        %v1779 = vld [vmem:[%s1760 + $0x90] sm:$0xff]
        %v1780 = vld [vmem:[%s1760 + $0x98] sm:$0xff]
        %v1781 = vld [vmem:[%s1760 + $0xa0] sm:$0xff]
        %v1782 = vld [vmem:[%s1760 + $0xa8] sm:$0xff]
        %v1783 = vld [vmem:[%s1760 + $0xb0] sm:$0xff]
        %v1784 = vld [vmem:[%s1760 + $0xb8] sm:$0xff]
        %v1785 = vld [vmem:[%s1760 + $0xc0] sm:$0xff]
        %v1786 = vld [vmem:[%s1760 + $0xc8] sm:$0xff]
        %v1787 = vld [vmem:[%s1760 + $0xd0] sm:$0xff]
        %v1788 = vld [vmem:[%s1760 + $0xd8] sm:$0xff]
        %v1789 = vld [vmem:[%s1760 + $0xe0] sm:$0xff]
        %v1790 = vld [vmem:[%s1760 + $0xe8] sm:$0xff]
        %v1791 = vld [vmem:[%s1760 + $0xf0] sm:$0xff]
        %v1792 = vld [vmem:[%s1760 + $0xf8] sm:$0xff]
        %v1793 = vld [vmem:[%s1760 + $0x100] sm:$0xff]
        %v1794 = vld [vmem:[%s1760 + $0x108] sm:$0xff]
        %v1795 = vld [vmem:[%s1760 + $0x110] sm:$0xff]
        %v1796 = vld [vmem:[%s1760 + $0x118] sm:$0xff]
        %v1797 = vrot.slane %v1470, 2
        %v1798 = vrot.slane %v1472, 2
        %v1799 = vsel %vm807, %v1797, %v1798
        %v1800 = vrot.slane %v1471, 2
        %v1801 = vrot.slane %v1473, 2
        %v1802 = vsel %vm807, %v1800, %v1801
        %v1803 = vrot.slane %v1474, 2
        %v1804 = vsel %vm807, %v1798, %v1803
        %v1805 = vrot.slane %v1475, 2
        %v1806 = vsel %vm807, %v1801, %v1805
        %v1809 = vsel %vm549, %v1802, 0
        %v1811 = vsel %vm549, %v1806, 0
        %1813 = vmatpush.msra.mxu0 %v1791
        %1814 = vmatpush.msra.mxu0 %v1789
        %1815 = vmatpush.msra.mxu0 %v1787
        %1816 = vmatpush.msra.mxu0 %v1785
        %1817 = vmatpush.msra.mxu0 %v1783
        %1818 = vmatpush.msra.mxu0 %v1781
        %1819 = vmatpush.msra.mxu0 %v1779
        %1820 = vmatpush.msra.mxu0 %v1777
        %1821 = vmatpush.msra.mxu0 %v1775
        %1822 = vmatpush.msra.mxu0 %v1773
        %1823 = vmatpush.msra.mxu0 %v1771
        %1824 = vmatpush.msra.mxu0 %v1769
        %1825 = vmatpush.msra.mxu0 %v1767
        %1826 = vmatpush.msra.mxu0 %v1765
        %1827 = vmatpush.msra.mxu0 %v1763
        %1828 = vmatpush.msra.mxu0 %v1761
        %1829 = vmatmul.f32.gmra.mxu0 %v1799
        %v1830 = vpop.f32.mrf.mxu0
        %v1831 = vadd.f32 0.0, %v1830
        %1832 = vmatmul.f32.gmra.mxu0 %v1804
        %v1833 = vpop.f32.mrf.mxu0
        %v1834 = vadd.f32 0.0, %v1833
        %1835 = vdwg.mxu0
        %1836 = vmatpush.msra.mxu0 0.0
        %1837 = vmatpush.msra.mxu0 0.0
        %1838 = vmatpush.msra.mxu0 0.0
        %1839 = vmatpush.msra.mxu0 0.0
        %1840 = vmatpush.msra.mxu0 0.0
        %1841 = vmatpush.msra.mxu0 0.0
        %1842 = vmatpush.msra.mxu0 0.0
        %1843 = vmatpush.msra.mxu0 0.0
        %1844 = vmatpush.msra.mxu0 0.0
        %1845 = vmatpush.msra.mxu0 0.0
        %1846 = vmatpush.msra.mxu0 0.0
        %1847 = vmatpush.msra.mxu0 0.0
        %1848 = vmatpush.msra.mxu0 0.0
        %1849 = vmatpush.msra.mxu0 0.0
        %1850 = vmatpush.msra.mxu0 %v1795
        %1851 = vmatpush.msra.mxu0 %v1793
        %1852 = vmatmul.f32.gmra.mxu0 %v1809
        %v1853 = vpop.f32.mrf.mxu0
        %v1854 = vadd.f32 %v1831, %v1853
        %1855 = vmatmul.f32.gmra.mxu0 %v1811
        %v1856 = vpop.f32.mrf.mxu0
        %v1857 = vadd.f32 %v1834, %v1856
        %1858 = vdwg.mxu0
        %1859 = vmatpush.msra.mxu0 %v1792
        %1860 = vmatpush.msra.mxu0 %v1790
        %1861 = vmatpush.msra.mxu0 %v1788
        %1862 = vmatpush.msra.mxu0 %v1786
        %1863 = vmatpush.msra.mxu0 %v1784
        %1864 = vmatpush.msra.mxu0 %v1782
        %1865 = vmatpush.msra.mxu0 %v1780
        %1866 = vmatpush.msra.mxu0 %v1778
        %1867 = vmatpush.msra.mxu0 %v1776
        %1868 = vmatpush.msra.mxu0 %v1774
        %1869 = vmatpush.msra.mxu0 %v1772
        %1870 = vmatpush.msra.mxu0 %v1770
        %1871 = vmatpush.msra.mxu0 %v1768
        %1872 = vmatpush.msra.mxu0 %v1766
        %1873 = vmatpush.msra.mxu0 %v1764
        %1874 = vmatpush.msra.mxu0 %v1762
        %1875 = vmatmul.f32.gmra.mxu0 %v1799
        %v1876 = vpop.f32.mrf.mxu0
        %v1877 = vadd.f32 0.0, %v1876
        %1878 = vmatmul.f32.gmra.mxu0 %v1804
        %v1879 = vpop.f32.mrf.mxu0
        %v1880 = vadd.f32 0.0, %v1879
        %1881 = vdwg.mxu0
        %1882 = vmatpush.msra.mxu0 0.0
        %1883 = vmatpush.msra.mxu0 0.0
        %1884 = vmatpush.msra.mxu0 0.0
        %1885 = vmatpush.msra.mxu0 0.0
        %1886 = vmatpush.msra.mxu0 0.0
        %1887 = vmatpush.msra.mxu0 0.0
        %1888 = vmatpush.msra.mxu0 0.0
        %1889 = vmatpush.msra.mxu0 0.0
        %1890 = vmatpush.msra.mxu0 0.0
        %1891 = vmatpush.msra.mxu0 0.0
        %1892 = vmatpush.msra.mxu0 0.0
        %1893 = vmatpush.msra.mxu0 0.0
        %1894 = vmatpush.msra.mxu0 0.0
        %1895 = vmatpush.msra.mxu0 0.0
        %1896 = vmatpush.msra.mxu0 %v1796
        %1897 = vmatpush.msra.mxu0 %v1794
        %1898 = vmatmul.f32.gmra.mxu0 %v1809
        %v1899 = vpop.f32.mrf.mxu0
        %v1900 = vadd.f32 %v1877, %v1899
        %1901 = vmatmul.f32.gmra.mxu0 %v1811
        %v1902 = vpop.f32.mrf.mxu0
        %v1903 = vadd.f32 %v1880, %v1902
        %1904 = vdwg.mxu0
        %v1905 = vadd.f32 %v1709, %v1854
        %v1906 = vadd.f32 %v1755, %v1900
        %v1907 = vadd.f32 %v1712, %v1857
        %v1908 = vadd.f32 %v1758, %v1903
        %1909 = vst [vmem:[%s414] sm:$0xff] %v1905
        %1910 = vst.msk [vmem:[%s414 + $0x8] sm:$0xff] %vm549, %v1906
        %1911 = vst [vmem:[%s414 + $0x10] sm:$0xff] %v1907
        %1912 = vst.msk [vmem:[%s414 + $0x18] sm:$0xff] %vm549, %v1908
        %s1913 = sand.u32 %s207, 1
        %s1914 = scalar_lea.sflag [#allocation4], %s1913
        %s1915 = sand.u32 %s207, 1
        %s1916 = smul.addr %s1915, 32
        %s1917 = scalar_lea.vmem [#allocation14], %s1916
        // Predicated region
        $region81: #{tpu_custom_call.1} parent=51 // pred_check
          %p1918 = pneg %p217
        $region82: #{tpu_custom_call.1} parent=51 // pred_check_branch
          %1920 = sbr.rel (%p1918) target = $region84
        $region83: #{tpu_custom_call.1} parent=51 // pred_region
          %1922 = vsyncadd %s1914, 0
          %s1923 = smul.addr %s26, 4
          %s1924 = smul.addr %s1923, 8
          %s1925 = scalar_lea.hbm %s8, %s1924
          %s1926 = sshll.u32 %s1917, 4
          %s1927 = int_to_ptr.vmem [resolvable:$true] %s1926
          %s1928 = sshll.u32 %s1925, 4
          %s1929 = int_to_ptr.hbm [resolvable:$true] %s1928
          %1934 = dma.vmem_to_hbm [thread:$0]  %s1927, 512, %s1929, %s1914, 256, 256, 16
        $region84: #{tpu_custom_call.1} parent=51 // pred_fallthru
          _
      $region52: #{tpu_custom_call.1} parent=5 // pred_fallthru
        _
      %p1935 = scmp.le.s32.totalorder 2, %s21
      // Predicated region
      $region85: #{tpu_custom_call.1} parent=5 // pred_check
        %p1936 = pneg %p1935
      $region86: #{tpu_custom_call.1} parent=5 // pred_check_branch
        %1938 = sbr.rel (%p1936) target = $region88
      $region87: #{tpu_custom_call.1} parent=5 // pred_region
        %s1939 = ssub.s32 %s21, 2
        // Predicated region
        $region89: #{tpu_custom_call.1} parent=87 // pred_check
          %p1940 = pneg %p223
        $region90: #{tpu_custom_call.1} parent=87 // pred_check_branch
          %1942 = sbr.rel (%p1940) target = $region92
        $region91: #{tpu_custom_call.1} parent=87 // pred_region
          %s1943 = sand.u32 %s208, 1
          %s1944 = scalar_lea.sflag [#allocation4], %s1943
          %s1945 = sand.u32 %s208, 1
          %s1946 = smul.addr %s1945, 32
          %s1947 = scalar_lea.vmem [#allocation14], %s1946
          %1949 = dma.done %s1944, 512
        $region92: #{tpu_custom_call.1} parent=87 // pred_fallthru
          _
      $region88: #{tpu_custom_call.1} parent=5 // pred_fallthru
        _
    $region6: #{tpu_custom_call.1} parent=1 // loop_footer
      %s25 = sadd.s32 1, %s21
    $region7: #{tpu_custom_call.1} parent=1 // loop_footer_branch
      %20 = sbr.rel target = $region3
    $region8: #{tpu_custom_call.1} parent=1 // loop_exit
      _
    %1950 = vsyncpa [#allocation3], 1
    %s1951 = scalar_lea.sflag [#allocation3], 1
    %1952 = vsyncpa %s1951, 1
    %1953 = vsyncpa [#allocation6], 1
    %1954 = vsyncpa [#allocation9], 1
    %1955 = vsyncpa [#allocation12], 1
    %1956 = vsyncpa [#allocation4], 1
    %s1957 = scalar_lea.sflag [#allocation4], 1
    %1958 = vsyncpa %s1957, 1

</llo_original>
